<compile_context>
chip_gen: v6e
topology: v6e:2x2x1
jax: 0.10.0
libtpu: 0.0.40
codegen_flags: <defaults>
</compile_context>

<pallas_src>
import functools

import jax
import jax.numpy as jnp
from jax import lax
from jax.experimental import pallas as pl
from jax.experimental.pallas import tpu as pltpu


# ----------------------------------------------------------------------------
# Fused Pallas kernel: predict -> need_recruit -> (recruit + re-predict)
# ----------------------------------------------------------------------------
def _fused_forward_kernel(scal_ref, x_ref, w_ref, attn_ref, active_ref,
                          wcls_ref, state_ref, y_ref, wout_ref,
                          *, r, q, c, phi, k_int, n_classes, n_units,
                          n_cls_sub):
    """scal_ref  : SMEM (2,) int32   [first_trial, argmax(y_true)]
    x_ref     : (n_dims, 1)          current stimulus (column)
    w_ref     : (n_dims, n_units)    unit positions (Distance.weight.T)
    attn_ref  : (n_dims, 1)          dimension-wise attention weights
    active_ref: (1, n_units)         MaskLayer.active_units
    wcls_ref  : (n_cls_sub, n_units) ClsLayer.weight, sublane-padded rows
    state_ref : (8, n_units)   out: row0=act, row1=winning mask, row2=active
    y_ref     : (n_cls_sub, 128) out: logits broadcast across lanes
    wout_ref  : (n_dims, n_units) out: (possibly recruited) unit positions
    """
    first_trial = scal_ref[0]
    target = scal_ref[1].astype(jnp.float32)

    x = x_ref[...]
    w = w_ref[...]
    attn = attn_ref[...]
    active = active_ref[...]
    wcls = wcls_ref[...]

    lanef = lax.broadcasted_iota(jnp.int32, (1, n_units), 1).astype(jnp.float32)
    crowf = lax.broadcasted_iota(jnp.int32, (n_cls_sub, 1), 0).astype(jnp.float32)
    cls_valid = crowf < n_classes                                # (Csub, 1)
    state_row = lax.broadcasted_iota(jnp.int32, (8, n_units), 0)

    # ---- Distance -> DimWiseAttention -> ClusterActivation (VPU/EUP) -------
    def cluster_act(w_units):
        dim_dist = jnp.abs(x - w_units)                          # (D, N)
        if r == 1:
            dr = dim_dist
        elif r == 2:
            dr = dim_dist * dim_dist
        else:
            dr = dim_dist ** r
        s = jnp.sum(attn * dr, axis=0, keepdims=True)            # (1, N)
        if r == 1:
            dist = s
        elif r == 2:
            dist = jnp.sqrt(s)
        else:
            # guard s == 0 against exp(log(0)) in the fractional-pow lowering
            dist = jnp.where(s > 0.0, jnp.where(s > 0.0, s, 1.0) ** (1.0 / r),
                             0.0)
        if q == 1:
            dq = dist
        elif q == 2:
            dq = dist * dist
        else:
            dq = dist ** q
        return jnp.exp(-c * dq)                                  # (1, N)

    # ---- O(k*N) top-count selection (replaces O(N^2) rank counting) --------
    # Selects up to `count` units with the largest positive `score`; ties
    # broken by lowest index; zero scores are never selected.
    def select_top(score, count):
        win = jnp.zeros((1, n_units), jnp.float32)
        rem = score
        for t in range(k_int):                                   # static unroll
            m = jnp.max(rem, keepdims=True)                      # (1, 1)
            j = jnp.min(jnp.where(rem == m, lanef, float(n_units)),
                        keepdims=True)                           # (1, 1)
            sel = (lanef == j) & (m > 0.0) & (count > float(t))
            win = jnp.where(sel, 1.0, win)
            rem = jnp.where(sel, 0.0, rem)
        return win

    # ---- ClsLayer on the VPU: y[cls] = phi * sum_j act_win[j] * W[cls, j] --
    def classify(act_win):
        aw = jnp.broadcast_to(act_win, (n_cls_sub, n_units))
        return phi * jnp.sum(wcls * aw, axis=1, keepdims=True)   # (Csub, 1)

    def predict(w_units, active_mask):
        act = cluster_act(w_units)
        win = select_top(act * active_mask, float(k_int))
        y = classify(act * win)
        return act, win, y

    def pack_state(act, win, active_mask):
        a8 = jnp.broadcast_to(act, (8, n_units))
        b8 = jnp.broadcast_to(win, (8, n_units))
        c8 = jnp.broadcast_to(active_mask, (8, n_units))
        return jnp.where(state_row == 0, a8,
               jnp.where(state_row == 1, b8,
               jnp.where(state_row == 2, c8, 0.0)))

    # ---- first prediction ---------------------------------------------------
    act1, win1, y1 = predict(w, active)

    # ---- need_recruit: wrong prediction OR all-zero logits, and a free unit -
    y1v = jnp.where(cls_valid, y1, -jnp.inf)
    pred1 = jnp.min(jnp.where(y1v == jnp.max(y1v), crowf, float(n_cls_sub)))
    wrong = pred1 != target
    # exact-zero test kept to match the original module (fragile once trained)
    all_zero = jnp.max(jnp.abs(jnp.where(cls_valid, y1, 0.0))) == 0.0
    # reviewer-suggested free-unit test (original counted exact-zero weights)
    has_free = jnp.sum(active) < float(n_units)
    do_recruit = (wrong | all_zero) & has_free

    # ---- no-recruit outputs (overwritten below when recruiting) ------------
    state_ref[...] = pack_state(act1, win1, active)
    y_ref[...] = jnp.broadcast_to(y1, (n_cls_sub, 128))
    wout_ref[...] = w

    # ---- recruit_units + re-prediction, fused under pl.when ----------------
    @pl.when(do_recruit)
    def _():
        # #units to recruit: first trial -> k_int, else #winners of the first
        # prediction whose per-unit classifier argmax != target.
        wv = jnp.where(cls_valid, wcls, -jnp.inf)                # (Csub, N)
        colmax = jnp.max(wv, axis=0, keepdims=True)              # (1, N)
        unit_pred = jnp.min(jnp.where(wv == colmax, crowf, float(n_cls_sub)),
                            axis=0, keepdims=True)               # (1, N)
        mispred = jnp.where(unit_pred != target, 1.0, 0.0)       # (1, N)
        n_mispred = jnp.sum(win1 * mispred, keepdims=True)       # (1, 1)
        count = jnp.where(first_trial > 0, float(k_int), n_mispred)

        # candidate score: raw act on the first trial, inactive units' act
        # afterwards (zero-act candidates are never recruited).
        score = jnp.where(first_trial > 0, act1, act1 * (1.0 - active))
        recruited = select_top(score, count)
        new_active = jnp.maximum(active, recruited)
        new_w = jnp.where(recruited > 0.0, x, w)                 # recruits -> x

        # TODO(synk): the final winning mask is re-derived by the Mask layer
        # from the new active set (re-prediction), rather than the manual
        # winning_units assignment inside recruit_units of the original.
        act2, win2, y2 = predict(new_w, new_active)

        state_ref[...] = pack_state(act2, win2, new_active)
        y_ref[...] = jnp.broadcast_to(y2, (n_cls_sub, 128))
        wout_ref[...] = new_w


# ----------------------------------------------------------------------------
# Whole forward step: ONE pallas_call, fully device-side, jitted.
# ----------------------------------------------------------------------------
def _forward_step(x, y_true, first_trial, units_pos_T, attn_col, cls_w_sub,
                  active_units, *, r, q, c, phi, k_int, n_classes, n_units,
                  n_dims, n_cls_sub):
    x_col = x.astype(jnp.float32).reshape(n_dims, 1)
    target = jnp.argmax(y_true).astype(jnp.int32)
    scalars = jnp.stack([first_trial.astype(jnp.int32), target])

    kernel = functools.partial(
        _fused_forward_kernel, r=r, q=q, c=c, phi=phi, k_int=k_int,
        n_classes=n_classes, n_units=n_units, n_cls_sub=n_cls_sub)

    state, y_slab, w_new = pl.pallas_call(
        kernel,
        out_shape=(
            jax.ShapeDtypeStruct((8, n_units), jnp.float32),
            jax.ShapeDtypeStruct((n_cls_sub, 128), jnp.float32),
            jax.ShapeDtypeStruct((n_dims, n_units), jnp.float32),
        ),
        grid_spec=pltpu.PrefetchScalarGridSpec(
            num_scalar_prefetch=1,
            grid=(1,),
            in_specs=[
                pl.BlockSpec((n_dims, 1), lambda i, s: (0, 0)),
                pl.BlockSpec((n_dims, n_units), lambda i, s: (0, 0)),
                pl.BlockSpec((n_dims, 1), lambda i, s: (0, 0)),
                pl.BlockSpec((1, n_units), lambda i, s: (0, 0)),
                pl.BlockSpec((n_cls_sub, n_units), lambda i, s: (0, 0)),
            ],
            out_specs=[
                pl.BlockSpec((8, n_units), lambda i, s: (0, 0)),
                pl.BlockSpec((n_cls_sub, 128), lambda i, s: (0, 0)),
                pl.BlockSpec((n_dims, n_units), lambda i, s: (0, 0)),
            ],
        ),
        compiler_params=pltpu.CompilerParams(
            dimension_semantics=("arbitrary",)),
    )(scalars, x_col, units_pos_T, attn_col,
      active_units.reshape(1, n_units), cls_w_sub)

    act = state[0]
    win = state[1]
    new_active = state[2]
    y_logits = y_slab[:n_classes, 0]
    return y_logits, act, win, new_active, w_new


# ----------------------------------------------------------------------------
# MultiUnitCluster forward-pass (functional state, fused Pallas compute)
# ----------------------------------------------------------------------------
class MultiUnitClusterPallas:
    def __init__(self, config, key):
        self.n_units = config["n_units"]
        self.n_dims = config["n_dims"]
        self.r = config["r"]
        self.q = 1                                  # ClusterActvLayer(q=1, ...)
        self.c = config["c"]
        self.n_classes = config["n_classes"]
        self.phi = config["phi"]
        self.k = config["k"]
        self.k_int = max(int(self.n_units * self.k), 1)
        self.n_cls_sub = max(((self.n_classes + 7) // 8) * 8, 8)

        # Lane-dense layout requirement (review item): keep n_units a multiple
        # of 128 so every (.., n_units) store is a full unmasked vst.
        assert self.n_units % 128 == 0, \
            "pad n_units to a multiple of 128 (mark pad units inactive)"

        # Deterministic parameter init (synthetic, not a checkpoint load),
        # stored in kernel-friendly layouts:
        #   Distance.weight         -> units_pos_T (n_dims, n_units), U[0,1)
        #   DimWiseAttention.weight -> attn (n_dims, 1), 1/n_dims each
        #   ClsLayer.weight         -> cls_w_sub (n_cls_sub, n_units), zeros
        #   MaskLayer active/winning buffers (n_units,): zeros
        self.units_pos_T = jax.random.uniform(
            key, (self.n_units, self.n_dims), dtype=jnp.float32).T
        self.attn = jnp.full((self.n_dims, 1), 1.0 / self.n_dims, jnp.float32)
        self.cls_w_sub = jnp.zeros((self.n_cls_sub, self.n_units), jnp.float32)
        self.active_units = jnp.zeros((self.n_units,), jnp.float32)
        self.winning_units = jnp.zeros((self.n_units,), jnp.float32)

        self._step = jax.jit(functools.partial(
            _forward_step, r=self.r, q=self.q, c=self.c, phi=self.phi,
            k_int=self.k_int, n_classes=self.n_classes, n_units=self.n_units,
            n_dims=self.n_dims, n_cls_sub=self.n_cls_sub))

    # ------------------------------------------------------------------ #
    def forward(self, x, epoch, i, y_true):
        first_trial = jnp.asarray(1 if (epoch == 0 and i == 0) else 0,
                                  jnp.int32)
        y_logits, act, win, active, w_new = self._step(
            jnp.asarray(x, jnp.float32), jnp.asarray(y_true, jnp.float32),
            first_trial, self.units_pos_T, self.attn, self.cls_w_sub,
            self.active_units)
        self.active_units = active
        self.winning_units = win
        self.units_pos_T = w_new
        # TODO(synk): winner INDEX extraction (np.flatnonzero of the mask) is
        # left to the caller to avoid a per-trial device->host sync.
        # TODO(synk): trial-batching via a grid axis was not applied because
        # ClsLayer/attention weights are updated outside forward() between
        # trials (train.py), so per-trial launches preserve semantics.
        return y_logits, act, win


# ----------------------------------------------------------------------------
if __name__ == "__main__":
    config = {
        "attn_type": "dimensional_local",
        "n_units": 128,
        "n_dims": 8,
        "r": 1,
        "c": 1.0,
        "n_classes": 4,
        "phi": 1.5,
        "lr_nn": 0.1,
        "lr_clusters": 0.05,
        "lr_attn": 0.01,
        "k": 0.0625,       # -> 8 winning units
        "noise": False,
        "lesion": None,
        "optim": "sgd",
        "loss_fn": "crossentropy",
    }

    key = jax.random.PRNGKey(0)
    k_w, k_x = jax.random.split(key)

    model = MultiUnitClusterPallas(config, k_w)

    x = jax.random.uniform(k_x, (config["n_dims"],), dtype=jnp.float32)
    y_true = jnp.zeros((config["n_classes"],), jnp.float32).at[1].set(1.0)

    # Trial 0: zero weights -> all-zero logits -> recruit -> re-predict
    # (all inside the single fused kernel).
    y1, act1, win1 = model.forward(x, epoch=0, i=0, y_true=y_true)
    # Trial 1: exercises the non-first-trial (mispredicting-winner) recruit
    # path, same jit trace.
    y2, act2, win2 = model.forward(x, epoch=0, i=1, y_true=y_true)

    jax.block_until_ready((y1, act1, win1, y2, act2, win2,
                           model.active_units, model.units_pos_T))

    assert y1.shape == (config["n_classes"],)
    assert y2.shape == (config["n_classes"],)
    assert act1.shape == (config["n_units"],)
    # Single host transfer, only at the demo boundary:
    assert float(jnp.sum(win1)) == float(model.k_int)
    assert float(jnp.sum(win2)) == float(model.k_int)
    assert bool(jnp.all(act1 > 0.0)) and bool(jnp.all(act2 > 0.0))
    assert float(jnp.sum(model.active_units)) >= float(model.k_int)
    assert bool(jnp.all(jnp.isfinite(y1))) and bool(jnp.all(jnp.isfinite(y2)))

    print("KERNEL_OK")
</pallas_src>

<mosaic_0001>
module attributes {stable_mosaic.version = 11 : i64} {
  func.func @_fused_forward_kernel(%arg0: i32, %arg1: memref<2xi32, #tpu.memory_space<smem>>, %arg2: memref<8x1xf32, #tpu.memory_space<vmem>>, %arg3: memref<8x128xf32, #tpu.memory_space<vmem>>, %arg4: memref<8x1xf32, #tpu.memory_space<vmem>>, %arg5: memref<1x128xf32, #tpu.memory_space<vmem>>, %arg6: memref<8x128xf32, #tpu.memory_space<vmem>>, %arg7: memref<8x128xf32, #tpu.memory_space<vmem>>, %arg8: memref<8x128xf32, #tpu.memory_space<vmem>>, %arg9: memref<8x128xf32, #tpu.memory_space<vmem>>) attributes {dimension_semantics = [#tpu.dimension_semantics<arbitrary>], iteration_bounds = array<i64: 1>, scalar_prefetch = 1 : i64, scratch_operands = 0 : i64, tpu.core_type = #tpu.core_type<tc>, window_params = [{pipeline_mode = #tpu.pipeline_mode<synchronous>, transform_indices = @transform_0, window_bounds = array<i64: 8, 1>}, {pipeline_mode = #tpu.pipeline_mode<synchronous>, transform_indices = @transform_1, window_bounds = array<i64: 8, 128>}, {pipeline_mode = #tpu.pipeline_mode<synchronous>, transform_indices = @transform_2, window_bounds = array<i64: 8, 1>}, {pipeline_mode = #tpu.pipeline_mode<synchronous>, transform_indices = @transform_3, window_bounds = array<i64: 1, 128>}, {pipeline_mode = #tpu.pipeline_mode<synchronous>, transform_indices = @transform_4, window_bounds = array<i64: 8, 128>}, {pipeline_mode = #tpu.pipeline_mode<synchronous>, transform_indices = @transform_5, window_bounds = array<i64: 8, 128>}, {pipeline_mode = #tpu.pipeline_mode<synchronous>, transform_indices = @transform_6, window_bounds = array<i64: 8, 128>}, {pipeline_mode = #tpu.pipeline_mode<synchronous>, transform_indices = @transform_7, window_bounds = array<i64: 8, 128>}]} {
    %c0 = arith.constant 0 : index
    %0 = memref.load %arg1[%c0] : memref<2xi32, #tpu.memory_space<smem>>
    %c1 = arith.constant 1 : index
    %1 = memref.load %arg1[%c1] : memref<2xi32, #tpu.memory_space<smem>>
    %2 = arith.sitofp %1 : i32 to f32
    %c0_0 = arith.constant 0 : index
    %c0_1 = arith.constant 0 : index
    %3 = vector.load %arg2[%c0_0, %c0_1] : memref<8x1xf32, #tpu.memory_space<vmem>>, vector<8x1xf32>
    %c0_2 = arith.constant 0 : index
    %c0_3 = arith.constant 0 : index
    %4 = vector.load %arg3[%c0_2, %c0_3] : memref<8x128xf32, #tpu.memory_space<vmem>>, vector<8x128xf32>
    %c0_4 = arith.constant 0 : index
    %c0_5 = arith.constant 0 : index
    %5 = vector.load %arg4[%c0_4, %c0_5] : memref<8x1xf32, #tpu.memory_space<vmem>>, vector<8x1xf32>
    %c0_6 = arith.constant 0 : index
    %c0_7 = arith.constant 0 : index
    %6 = vector.load %arg5[%c0_6, %c0_7] : memref<1x128xf32, #tpu.memory_space<vmem>>, vector<1x128xf32>
    %c0_8 = arith.constant 0 : index
    %c0_9 = arith.constant 0 : index
    %7 = vector.load %arg6[%c0_8, %c0_9] : memref<8x128xf32, #tpu.memory_space<vmem>>, vector<8x128xf32>
    %8 = tpu.iota {dimensions = array<i32: 1>} : vector<1x128xi32>
    %9 = arith.sitofp %8 : vector<1x128xi32> to vector<1x128xf32>
    %10 = tpu.iota {dimensions = array<i32: 0>} : vector<8x1xi32>
    %11 = arith.sitofp %10 : vector<8x1xi32> to vector<8x1xf32>
    %cst = arith.constant 4.000000e+00 : f32
    %12 = vector.broadcast %cst : f32 to vector<8x1xf32>
    %13 = arith.cmpf olt, %11, %12 : vector<8x1xf32>
    %14 = tpu.iota {dimensions = array<i32: 0>} : vector<8x128xi32>
    %15 = vector.broadcast %3 : vector<8x1xf32> to vector<8x128xf32>
    %16 = arith.subf %15, %4 : vector<8x128xf32>
    %17 = math.absf %16 : vector<8x128xf32>
    %18 = vector.broadcast %5 : vector<8x1xf32> to vector<8x128xf32>
    %19 = arith.mulf %18, %17 : vector<8x128xf32>
    %cst_10 = arith.constant dense<0.000000e+00> : vector<128xf32>
    %20 = vector.multi_reduction <add>, %19, %cst_10 [0] : vector<8x128xf32> to vector<128xf32>
    %21 = vector.shape_cast %20 : vector<128xf32> to vector<1x128xf32>
    %cst_11 = arith.constant -1.000000e+00 : f32
    %22 = vector.broadcast %cst_11 : f32 to vector<1x128xf32>
    %23 = arith.mulf %22, %21 : vector<1x128xf32>
    %24 = math.exp %23 : vector<1x128xf32>
    %25 = arith.mulf %24, %6 : vector<1x128xf32>
    %cst_12 = arith.constant 0.000000e+00 : f32
    %26 = vector.broadcast %cst_12 : f32 to vector<1x128xf32>
    %27 = vector.shape_cast %25 : vector<1x128xf32> to vector<1x1x128xf32>
    %cst_13 = arith.constant dense<0xFF800000> : vector<1xf32>
    %28 = vector.multi_reduction <maximumf>, %27, %cst_13 [1, 2] : vector<1x1x128xf32> to vector<1xf32>
    %29 = vector.shape_cast %28 : vector<1xf32> to vector<1x1x1xf32>
    %30 = vector.extract %29[0, 0, 0] : f32 from vector<1x1x1xf32>
    %31 = vector.broadcast %30 : f32 to vector<1x1xf32>
    %32 = vector.broadcast %31 : vector<1x1xf32> to vector<1x128xf32>
    %33 = arith.cmpf oeq, %25, %32 : vector<1x128xf32>
    %cst_14 = arith.constant 1.280000e+02 : f32
    %34 = vector.broadcast %cst_14 : f32 to vector<1x128xf32>
    %35 = arith.select %33, %9, %34 : vector<1x128xi1>, vector<1x128xf32>
    %36 = vector.shape_cast %35 : vector<1x128xf32> to vector<1x1x128xf32>
    %cst_15 = arith.constant dense<0x7F800000> : vector<1xf32>
    %37 = vector.multi_reduction <minimumf>, %36, %cst_15 [1, 2] : vector<1x1x128xf32> to vector<1xf32>
    %38 = vector.shape_cast %37 : vector<1xf32> to vector<1x1x1xf32>
    %39 = vector.extract %38[0, 0, 0] : f32 from vector<1x1x1xf32>
    %40 = vector.broadcast %39 : f32 to vector<1x1xf32>
    %41 = vector.broadcast %40 : vector<1x1xf32> to vector<1x128xf32>
    %42 = arith.cmpf oeq, %9, %41 : vector<1x128xf32>
    %cst_16 = arith.constant 0.000000e+00 : f32
    %43 = vector.broadcast %cst_16 : f32 to vector<1x1xf32>
    %44 = arith.cmpf ogt, %31, %43 : vector<1x1xf32>
    %45 = vector.broadcast %44 : vector<1x1xi1> to vector<1x128xi1>
    %46 = arith.andi %42, %45 : vector<1x128xi1>
    %true = arith.constant true
    %47 = vector.broadcast %true : i1 to vector<1x128xi1>
    %48 = arith.andi %46, %47 : vector<1x128xi1>
    %cst_17 = arith.constant 1.000000e+00 : f32
    %49 = vector.broadcast %cst_17 : f32 to vector<1x128xf32>
    %50 = arith.select %48, %49, %26 : vector<1x128xi1>, vector<1x128xf32>
    %cst_18 = arith.constant 0.000000e+00 : f32
    %51 = vector.broadcast %cst_18 : f32 to vector<1x128xf32>
    %52 = arith.select %48, %51, %25 : vector<1x128xi1>, vector<1x128xf32>
    %53 = vector.shape_cast %52 : vector<1x128xf32> to vector<1x1x128xf32>
    %cst_19 = arith.constant dense<0xFF800000> : vector<1xf32>
    %54 = vector.multi_reduction <maximumf>, %53, %cst_19 [1, 2] : vector<1x1x128xf32> to vector<1xf32>
    %55 = vector.shape_cast %54 : vector<1xf32> to vector<1x1x1xf32>
    %56 = vector.extract %55[0, 0, 0] : f32 from vector<1x1x1xf32>
    %57 = vector.broadcast %56 : f32 to vector<1x1xf32>
    %58 = vector.broadcast %57 : vector<1x1xf32> to vector<1x128xf32>
    %59 = arith.cmpf oeq, %52, %58 : vector<1x128xf32>
    %cst_20 = arith.constant 1.280000e+02 : f32
    %60 = vector.broadcast %cst_20 : f32 to vector<1x128xf32>
    %61 = arith.select %59, %9, %60 : vector<1x128xi1>, vector<1x128xf32>
    %62 = vector.shape_cast %61 : vector<1x128xf32> to vector<1x1x128xf32>
    %cst_21 = arith.constant dense<0x7F800000> : vector<1xf32>
    %63 = vector.multi_reduction <minimumf>, %62, %cst_21 [1, 2] : vector<1x1x128xf32> to vector<1xf32>
    %64 = vector.shape_cast %63 : vector<1xf32> to vector<1x1x1xf32>
    %65 = vector.extract %64[0, 0, 0] : f32 from vector<1x1x1xf32>
    %66 = vector.broadcast %65 : f32 to vector<1x1xf32>
    %67 = vector.broadcast %66 : vector<1x1xf32> to vector<1x128xf32>
    %68 = arith.cmpf oeq, %9, %67 : vector<1x128xf32>
    %cst_22 = arith.constant 0.000000e+00 : f32
    %69 = vector.broadcast %cst_22 : f32 to vector<1x1xf32>
    %70 = arith.cmpf ogt, %57, %69 : vector<1x1xf32>
    %71 = vector.broadcast %70 : vector<1x1xi1> to vector<1x128xi1>
    %72 = arith.andi %68, %71 : vector<1x128xi1>
    %true_23 = arith.constant true
    %73 = vector.broadcast %true_23 : i1 to vector<1x128xi1>
    %74 = arith.andi %72, %73 : vector<1x128xi1>
    %cst_24 = arith.constant 1.000000e+00 : f32
    %75 = vector.broadcast %cst_24 : f32 to vector<1x128xf32>
    %76 = arith.select %74, %75, %50 : vector<1x128xi1>, vector<1x128xf32>
    %cst_25 = arith.constant 0.000000e+00 : f32
    %77 = vector.broadcast %cst_25 : f32 to vector<1x128xf32>
    %78 = arith.select %74, %77, %52 : vector<1x128xi1>, vector<1x128xf32>
    %79 = vector.shape_cast %78 : vector<1x128xf32> to vector<1x1x128xf32>
    %cst_26 = arith.constant dense<0xFF800000> : vector<1xf32>
    %80 = vector.multi_reduction <maximumf>, %79, %cst_26 [1, 2] : vector<1x1x128xf32> to vector<1xf32>
    %81 = vector.shape_cast %80 : vector<1xf32> to vector<1x1x1xf32>
    %82 = vector.extract %81[0, 0, 0] : f32 from vector<1x1x1xf32>
    %83 = vector.broadcast %82 : f32 to vector<1x1xf32>
    %84 = vector.broadcast %83 : vector<1x1xf32> to vector<1x128xf32>
    %85 = arith.cmpf oeq, %78, %84 : vector<1x128xf32>
    %cst_27 = arith.constant 1.280000e+02 : f32
    %86 = vector.broadcast %cst_27 : f32 to vector<1x128xf32>
    %87 = arith.select %85, %9, %86 : vector<1x128xi1>, vector<1x128xf32>
    %88 = vector.shape_cast %87 : vector<1x128xf32> to vector<1x1x128xf32>
    %cst_28 = arith.constant dense<0x7F800000> : vector<1xf32>
    %89 = vector.multi_reduction <minimumf>, %88, %cst_28 [1, 2] : vector<1x1x128xf32> to vector<1xf32>
    %90 = vector.shape_cast %89 : vector<1xf32> to vector<1x1x1xf32>
    %91 = vector.extract %90[0, 0, 0] : f32 from vector<1x1x1xf32>
    %92 = vector.broadcast %91 : f32 to vector<1x1xf32>
    %93 = vector.broadcast %92 : vector<1x1xf32> to vector<1x128xf32>
    %94 = arith.cmpf oeq, %9, %93 : vector<1x128xf32>
    %cst_29 = arith.constant 0.000000e+00 : f32
    %95 = vector.broadcast %cst_29 : f32 to vector<1x1xf32>
    %96 = arith.cmpf ogt, %83, %95 : vector<1x1xf32>
    %97 = vector.broadcast %96 : vector<1x1xi1> to vector<1x128xi1>
    %98 = arith.andi %94, %97 : vector<1x128xi1>
    %true_30 = arith.constant true
    %99 = vector.broadcast %true_30 : i1 to vector<1x128xi1>
    %100 = arith.andi %98, %99 : vector<1x128xi1>
    %cst_31 = arith.constant 1.000000e+00 : f32
    %101 = vector.broadcast %cst_31 : f32 to vector<1x128xf32>
    %102 = arith.select %100, %101, %76 : vector<1x128xi1>, vector<1x128xf32>
    %cst_32 = arith.constant 0.000000e+00 : f32
    %103 = vector.broadcast %cst_32 : f32 to vector<1x128xf32>
    %104 = arith.select %100, %103, %78 : vector<1x128xi1>, vector<1x128xf32>
    %105 = vector.shape_cast %104 : vector<1x128xf32> to vector<1x1x128xf32>
    %cst_33 = arith.constant dense<0xFF800000> : vector<1xf32>
    %106 = vector.multi_reduction <maximumf>, %105, %cst_33 [1, 2] : vector<1x1x128xf32> to vector<1xf32>
    %107 = vector.shape_cast %106 : vector<1xf32> to vector<1x1x1xf32>
    %108 = vector.extract %107[0, 0, 0] : f32 from vector<1x1x1xf32>
    %109 = vector.broadcast %108 : f32 to vector<1x1xf32>
    %110 = vector.broadcast %109 : vector<1x1xf32> to vector<1x128xf32>
    %111 = arith.cmpf oeq, %104, %110 : vector<1x128xf32>
    %cst_34 = arith.constant 1.280000e+02 : f32
    %112 = vector.broadcast %cst_34 : f32 to vector<1x128xf32>
    %113 = arith.select %111, %9, %112 : vector<1x128xi1>, vector<1x128xf32>
    %114 = vector.shape_cast %113 : vector<1x128xf32> to vector<1x1x128xf32>
    %cst_35 = arith.constant dense<0x7F800000> : vector<1xf32>
    %115 = vector.multi_reduction <minimumf>, %114, %cst_35 [1, 2] : vector<1x1x128xf32> to vector<1xf32>
    %116 = vector.shape_cast %115 : vector<1xf32> to vector<1x1x1xf32>
    %117 = vector.extract %116[0, 0, 0] : f32 from vector<1x1x1xf32>
    %118 = vector.broadcast %117 : f32 to vector<1x1xf32>
    %119 = vector.broadcast %118 : vector<1x1xf32> to vector<1x128xf32>
    %120 = arith.cmpf oeq, %9, %119 : vector<1x128xf32>
    %cst_36 = arith.constant 0.000000e+00 : f32
    %121 = vector.broadcast %cst_36 : f32 to vector<1x1xf32>
    %122 = arith.cmpf ogt, %109, %121 : vector<1x1xf32>
    %123 = vector.broadcast %122 : vector<1x1xi1> to vector<1x128xi1>
    %124 = arith.andi %120, %123 : vector<1x128xi1>
    %true_37 = arith.constant true
    %125 = vector.broadcast %true_37 : i1 to vector<1x128xi1>
    %126 = arith.andi %124, %125 : vector<1x128xi1>
    %cst_38 = arith.constant 1.000000e+00 : f32
    %127 = vector.broadcast %cst_38 : f32 to vector<1x128xf32>
    %128 = arith.select %126, %127, %102 : vector<1x128xi1>, vector<1x128xf32>
    %cst_39 = arith.constant 0.000000e+00 : f32
    %129 = vector.broadcast %cst_39 : f32 to vector<1x128xf32>
    %130 = arith.select %126, %129, %104 : vector<1x128xi1>, vector<1x128xf32>
    %131 = vector.shape_cast %130 : vector<1x128xf32> to vector<1x1x128xf32>
    %cst_40 = arith.constant dense<0xFF800000> : vector<1xf32>
    %132 = vector.multi_reduction <maximumf>, %131, %cst_40 [1, 2] : vector<1x1x128xf32> to vector<1xf32>
    %133 = vector.shape_cast %132 : vector<1xf32> to vector<1x1x1xf32>
    %134 = vector.extract %133[0, 0, 0] : f32 from vector<1x1x1xf32>
    %135 = vector.broadcast %134 : f32 to vector<1x1xf32>
    %136 = vector.broadcast %135 : vector<1x1xf32> to vector<1x128xf32>
    %137 = arith.cmpf oeq, %130, %136 : vector<1x128xf32>
    %cst_41 = arith.constant 1.280000e+02 : f32
    %138 = vector.broadcast %cst_41 : f32 to vector<1x128xf32>
    %139 = arith.select %137, %9, %138 : vector<1x128xi1>, vector<1x128xf32>
    %140 = vector.shape_cast %139 : vector<1x128xf32> to vector<1x1x128xf32>
    %cst_42 = arith.constant dense<0x7F800000> : vector<1xf32>
    %141 = vector.multi_reduction <minimumf>, %140, %cst_42 [1, 2] : vector<1x1x128xf32> to vector<1xf32>
    %142 = vector.shape_cast %141 : vector<1xf32> to vector<1x1x1xf32>
    %143 = vector.extract %142[0, 0, 0] : f32 from vector<1x1x1xf32>
    %144 = vector.broadcast %143 : f32 to vector<1x1xf32>
    %145 = vector.broadcast %144 : vector<1x1xf32> to vector<1x128xf32>
    %146 = arith.cmpf oeq, %9, %145 : vector<1x128xf32>
    %cst_43 = arith.constant 0.000000e+00 : f32
    %147 = vector.broadcast %cst_43 : f32 to vector<1x1xf32>
    %148 = arith.cmpf ogt, %135, %147 : vector<1x1xf32>
    %149 = vector.broadcast %148 : vector<1x1xi1> to vector<1x128xi1>
    %150 = arith.andi %146, %149 : vector<1x128xi1>
    %true_44 = arith.constant true
    %151 = vector.broadcast %true_44 : i1 to vector<1x128xi1>
    %152 = arith.andi %150, %151 : vector<1x128xi1>
    %cst_45 = arith.constant 1.000000e+00 : f32
    %153 = vector.broadcast %cst_45 : f32 to vector<1x128xf32>
    %154 = arith.select %152, %153, %128 : vector<1x128xi1>, vector<1x128xf32>
    %cst_46 = arith.constant 0.000000e+00 : f32
    %155 = vector.broadcast %cst_46 : f32 to vector<1x128xf32>
    %156 = arith.select %152, %155, %130 : vector<1x128xi1>, vector<1x128xf32>
    %157 = vector.shape_cast %156 : vector<1x128xf32> to vector<1x1x128xf32>
    %cst_47 = arith.constant dense<0xFF800000> : vector<1xf32>
    %158 = vector.multi_reduction <maximumf>, %157, %cst_47 [1, 2] : vector<1x1x128xf32> to vector<1xf32>
    %159 = vector.shape_cast %158 : vector<1xf32> to vector<1x1x1xf32>
    %160 = vector.extract %159[0, 0, 0] : f32 from vector<1x1x1xf32>
    %161 = vector.broadcast %160 : f32 to vector<1x1xf32>
    %162 = vector.broadcast %161 : vector<1x1xf32> to vector<1x128xf32>
    %163 = arith.cmpf oeq, %156, %162 : vector<1x128xf32>
    %cst_48 = arith.constant 1.280000e+02 : f32
    %164 = vector.broadcast %cst_48 : f32 to vector<1x128xf32>
    %165 = arith.select %163, %9, %164 : vector<1x128xi1>, vector<1x128xf32>
    %166 = vector.shape_cast %165 : vector<1x128xf32> to vector<1x1x128xf32>
    %cst_49 = arith.constant dense<0x7F800000> : vector<1xf32>
    %167 = vector.multi_reduction <minimumf>, %166, %cst_49 [1, 2] : vector<1x1x128xf32> to vector<1xf32>
    %168 = vector.shape_cast %167 : vector<1xf32> to vector<1x1x1xf32>
    %169 = vector.extract %168[0, 0, 0] : f32 from vector<1x1x1xf32>
    %170 = vector.broadcast %169 : f32 to vector<1x1xf32>
    %171 = vector.broadcast %170 : vector<1x1xf32> to vector<1x128xf32>
    %172 = arith.cmpf oeq, %9, %171 : vector<1x128xf32>
    %cst_50 = arith.constant 0.000000e+00 : f32
    %173 = vector.broadcast %cst_50 : f32 to vector<1x1xf32>
    %174 = arith.cmpf ogt, %161, %173 : vector<1x1xf32>
    %175 = vector.broadcast %174 : vector<1x1xi1> to vector<1x128xi1>
    %176 = arith.andi %172, %175 : vector<1x128xi1>
    %true_51 = arith.constant true
    %177 = vector.broadcast %true_51 : i1 to vector<1x128xi1>
    %178 = arith.andi %176, %177 : vector<1x128xi1>
    %cst_52 = arith.constant 1.000000e+00 : f32
    %179 = vector.broadcast %cst_52 : f32 to vector<1x128xf32>
    %180 = arith.select %178, %179, %154 : vector<1x128xi1>, vector<1x128xf32>
    %cst_53 = arith.constant 0.000000e+00 : f32
    %181 = vector.broadcast %cst_53 : f32 to vector<1x128xf32>
    %182 = arith.select %178, %181, %156 : vector<1x128xi1>, vector<1x128xf32>
    %183 = vector.shape_cast %182 : vector<1x128xf32> to vector<1x1x128xf32>
    %cst_54 = arith.constant dense<0xFF800000> : vector<1xf32>
    %184 = vector.multi_reduction <maximumf>, %183, %cst_54 [1, 2] : vector<1x1x128xf32> to vector<1xf32>
    %185 = vector.shape_cast %184 : vector<1xf32> to vector<1x1x1xf32>
    %186 = vector.extract %185[0, 0, 0] : f32 from vector<1x1x1xf32>
    %187 = vector.broadcast %186 : f32 to vector<1x1xf32>
    %188 = vector.broadcast %187 : vector<1x1xf32> to vector<1x128xf32>
    %189 = arith.cmpf oeq, %182, %188 : vector<1x128xf32>
    %cst_55 = arith.constant 1.280000e+02 : f32
    %190 = vector.broadcast %cst_55 : f32 to vector<1x128xf32>
    %191 = arith.select %189, %9, %190 : vector<1x128xi1>, vector<1x128xf32>
    %192 = vector.shape_cast %191 : vector<1x128xf32> to vector<1x1x128xf32>
    %cst_56 = arith.constant dense<0x7F800000> : vector<1xf32>
    %193 = vector.multi_reduction <minimumf>, %192, %cst_56 [1, 2] : vector<1x1x128xf32> to vector<1xf32>
    %194 = vector.shape_cast %193 : vector<1xf32> to vector<1x1x1xf32>
    %195 = vector.extract %194[0, 0, 0] : f32 from vector<1x1x1xf32>
    %196 = vector.broadcast %195 : f32 to vector<1x1xf32>
    %197 = vector.broadcast %196 : vector<1x1xf32> to vector<1x128xf32>
    %198 = arith.cmpf oeq, %9, %197 : vector<1x128xf32>
    %cst_57 = arith.constant 0.000000e+00 : f32
    %199 = vector.broadcast %cst_57 : f32 to vector<1x1xf32>
    %200 = arith.cmpf ogt, %187, %199 : vector<1x1xf32>
    %201 = vector.broadcast %200 : vector<1x1xi1> to vector<1x128xi1>
    %202 = arith.andi %198, %201 : vector<1x128xi1>
    %true_58 = arith.constant true
    %203 = vector.broadcast %true_58 : i1 to vector<1x128xi1>
    %204 = arith.andi %202, %203 : vector<1x128xi1>
    %cst_59 = arith.constant 1.000000e+00 : f32
    %205 = vector.broadcast %cst_59 : f32 to vector<1x128xf32>
    %206 = arith.select %204, %205, %180 : vector<1x128xi1>, vector<1x128xf32>
    %cst_60 = arith.constant 0.000000e+00 : f32
    %207 = vector.broadcast %cst_60 : f32 to vector<1x128xf32>
    %208 = arith.select %204, %207, %182 : vector<1x128xi1>, vector<1x128xf32>
    %209 = vector.shape_cast %208 : vector<1x128xf32> to vector<1x1x128xf32>
    %cst_61 = arith.constant dense<0xFF800000> : vector<1xf32>
    %210 = vector.multi_reduction <maximumf>, %209, %cst_61 [1, 2] : vector<1x1x128xf32> to vector<1xf32>
    %211 = vector.shape_cast %210 : vector<1xf32> to vector<1x1x1xf32>
    %212 = vector.extract %211[0, 0, 0] : f32 from vector<1x1x1xf32>
    %213 = vector.broadcast %212 : f32 to vector<1x1xf32>
    %214 = vector.broadcast %213 : vector<1x1xf32> to vector<1x128xf32>
    %215 = arith.cmpf oeq, %208, %214 : vector<1x128xf32>
    %cst_62 = arith.constant 1.280000e+02 : f32
    %216 = vector.broadcast %cst_62 : f32 to vector<1x128xf32>
    %217 = arith.select %215, %9, %216 : vector<1x128xi1>, vector<1x128xf32>
    %218 = vector.shape_cast %217 : vector<1x128xf32> to vector<1x1x128xf32>
    %cst_63 = arith.constant dense<0x7F800000> : vector<1xf32>
    %219 = vector.multi_reduction <minimumf>, %218, %cst_63 [1, 2] : vector<1x1x128xf32> to vector<1xf32>
    %220 = vector.shape_cast %219 : vector<1xf32> to vector<1x1x1xf32>
    %221 = vector.extract %220[0, 0, 0] : f32 from vector<1x1x1xf32>
    %222 = vector.broadcast %221 : f32 to vector<1x1xf32>
    %223 = vector.broadcast %222 : vector<1x1xf32> to vector<1x128xf32>
    %224 = arith.cmpf oeq, %9, %223 : vector<1x128xf32>
    %cst_64 = arith.constant 0.000000e+00 : f32
    %225 = vector.broadcast %cst_64 : f32 to vector<1x1xf32>
    %226 = arith.cmpf ogt, %213, %225 : vector<1x1xf32>
    %227 = vector.broadcast %226 : vector<1x1xi1> to vector<1x128xi1>
    %228 = arith.andi %224, %227 : vector<1x128xi1>
    %true_65 = arith.constant true
    %229 = vector.broadcast %true_65 : i1 to vector<1x128xi1>
    %230 = arith.andi %228, %229 : vector<1x128xi1>
    %cst_66 = arith.constant 1.000000e+00 : f32
    %231 = vector.broadcast %cst_66 : f32 to vector<1x128xf32>
    %232 = arith.select %230, %231, %206 : vector<1x128xi1>, vector<1x128xf32>
    %233 = arith.mulf %24, %232 : vector<1x128xf32>
    %234 = vector.shape_cast %233 : vector<1x128xf32> to vector<1x128xf32>
    %235 = vector.broadcast %234 : vector<1x128xf32> to vector<8x128xf32>
    %236 = arith.mulf %7, %235 : vector<8x128xf32>
    %cst_67 = arith.constant dense<0.000000e+00> : vector<8xf32>
    %237 = vector.multi_reduction <add>, %236, %cst_67 [1] : vector<8x128xf32> to vector<8xf32>
    %238 = vector.shape_cast %237 : vector<8xf32> to vector<8x1xf32>
    %cst_68 = arith.constant 1.500000e+00 : f32
    %239 = vector.broadcast %cst_68 : f32 to vector<8x1xf32>
    %240 = arith.mulf %239, %238 : vector<8x1xf32>
    %cst_69 = arith.constant 0xFF800000 : f32
    %241 = vector.broadcast %cst_69 : f32 to vector<8x1xf32>
    %242 = arith.select %13, %240, %241 : vector<8x1xi1>, vector<8x1xf32>
    %243 = vector.shape_cast %242 : vector<8x1xf32> to vector<1x8x1xf32>
    %cst_70 = arith.constant dense<0xFF800000> : vector<1xf32>
    %244 = vector.multi_reduction <maximumf>, %243, %cst_70 [1, 2] : vector<1x8x1xf32> to vector<1xf32>
    %245 = vector.shape_cast %244 : vector<1xf32> to vector<1x1x1xf32>
    %246 = vector.extract %245[0, 0, 0] : f32 from vector<1x1x1xf32>
    %247 = vector.broadcast %246 : f32 to vector<8x1xf32>
    %248 = arith.cmpf oeq, %242, %247 : vector<8x1xf32>
    %cst_71 = arith.constant 8.000000e+00 : f32
    %249 = vector.broadcast %cst_71 : f32 to vector<8x1xf32>
    %250 = arith.select %248, %11, %249 : vector<8x1xi1>, vector<8x1xf32>
    %251 = vector.shape_cast %250 : vector<8x1xf32> to vector<1x8x1xf32>
    %cst_72 = arith.constant dense<0x7F800000> : vector<1xf32>
    %252 = vector.multi_reduction <minimumf>, %251, %cst_72 [1, 2] : vector<1x8x1xf32> to vector<1xf32>
    %253 = vector.shape_cast %252 : vector<1xf32> to vector<1x1x1xf32>
    %254 = vector.extract %253[0, 0, 0] : f32 from vector<1x1x1xf32>
    %255 = arith.cmpf one, %254, %2 : f32
    %cst_73 = arith.constant 0.000000e+00 : f32
    %256 = vector.broadcast %cst_73 : f32 to vector<8x1xf32>
    %257 = arith.select %13, %240, %256 : vector<8x1xi1>, vector<8x1xf32>
    %258 = math.absf %257 : vector<8x1xf32>
    %259 = vector.shape_cast %258 : vector<8x1xf32> to vector<1x8x1xf32>
    %cst_74 = arith.constant dense<0xFF800000> : vector<1xf32>
    %260 = vector.multi_reduction <maximumf>, %259, %cst_74 [1, 2] : vector<1x8x1xf32> to vector<1xf32>
    %261 = vector.shape_cast %260 : vector<1xf32> to vector<1x1x1xf32>
    %262 = vector.extract %261[0, 0, 0] : f32 from vector<1x1x1xf32>
    %cst_75 = arith.constant 0.000000e+00 : f32
    %263 = arith.cmpf oeq, %262, %cst_75 : f32
    %264 = vector.shape_cast %6 : vector<1x128xf32> to vector<1x1x128xf32>
    %cst_76 = arith.constant dense<0.000000e+00> : vector<1xf32>
    %265 = vector.multi_reduction <add>, %264, %cst_76 [1, 2] : vector<1x1x128xf32> to vector<1xf32>
    %266 = vector.shape_cast %265 : vector<1xf32> to vector<1x1x1xf32>
    %267 = vector.extract %266[0, 0, 0] : f32 from vector<1x1x1xf32>
    %cst_77 = arith.constant 1.280000e+02 : f32
    %268 = arith.cmpf olt, %267, %cst_77 : f32
    %269 = arith.ori %255, %263 : i1
    %270 = arith.andi %269, %268 : i1
    %271 = vector.shape_cast %24 : vector<1x128xf32> to vector<1x128xf32>
    %272 = vector.broadcast %271 : vector<1x128xf32> to vector<8x128xf32>
    %273 = vector.shape_cast %232 : vector<1x128xf32> to vector<1x128xf32>
    %274 = vector.broadcast %273 : vector<1x128xf32> to vector<8x128xf32>
    %275 = vector.shape_cast %6 : vector<1x128xf32> to vector<1x128xf32>
    %276 = vector.broadcast %275 : vector<1x128xf32> to vector<8x128xf32>
    %c0_i32 = arith.constant 0 : i32
    %277 = vector.broadcast %c0_i32 : i32 to vector<8x128xi32>
    %278 = arith.cmpi eq, %14, %277 : vector<8x128xi32>
    %c1_i32 = arith.constant 1 : i32
    %279 = vector.broadcast %c1_i32 : i32 to vector<8x128xi32>
    %280 = arith.cmpi eq, %14, %279 : vector<8x128xi32>
    %c2_i32 = arith.constant 2 : i32
    %281 = vector.broadcast %c2_i32 : i32 to vector<8x128xi32>
    %282 = arith.cmpi eq, %14, %281 : vector<8x128xi32>
    %cst_78 = arith.constant 0.000000e+00 : f32
    %283 = vector.broadcast %cst_78 : f32 to vector<8x128xf32>
    %284 = arith.select %282, %276, %283 : vector<8x128xi1>, vector<8x128xf32>
    %285 = arith.select %280, %274, %284 : vector<8x128xi1>, vector<8x128xf32>
    %286 = arith.select %278, %272, %285 : vector<8x128xi1>, vector<8x128xf32>
    %c0_79 = arith.constant 0 : index
    %c0_80 = arith.constant 0 : index
    %287 = vector.load %arg7[%c0_79, %c0_80] : memref<8x128xf32, #tpu.memory_space<vmem>>, vector<8x128xf32>
    tpu.vector_store %arg7[%c0_79, %c0_80], %286 {strides = array<i32>} : memref<8x128xf32, #tpu.memory_space<vmem>>, vector<8x128xf32>,
    %288 = vector.shape_cast %240 : vector<8x1xf32> to vector<8x1xf32>
    %289 = vector.broadcast %288 : vector<8x1xf32> to vector<8x128xf32>
    %c0_81 = arith.constant 0 : index
    %c0_82 = arith.constant 0 : index
    %290 = vector.load %arg8[%c0_81, %c0_82] : memref<8x128xf32, #tpu.memory_space<vmem>>, vector<8x128xf32>
    tpu.vector_store %arg8[%c0_81, %c0_82], %289 {strides = array<i32>} : memref<8x128xf32, #tpu.memory_space<vmem>>, vector<8x128xf32>,
    %c0_83 = arith.constant 0 : index
    %c0_84 = arith.constant 0 : index
    %291 = vector.load %arg9[%c0_83, %c0_84] : memref<8x128xf32, #tpu.memory_space<vmem>>, vector<8x128xf32>
    tpu.vector_store %arg9[%c0_83, %c0_84], %4 {strides = array<i32>} : memref<8x128xf32, #tpu.memory_space<vmem>>, vector<8x128xf32>,
    %292 = arith.extui %270 : i1 to i32
    %c0_i32_85 = arith.constant 0 : i32
    %293 = arith.cmpi ne, %292, %c0_i32_85 : i32
    scf.if %293 {
      %cst_86 = arith.constant 0xFF800000 : f32
      %294 = vector.shape_cast %13 : vector<8x1xi1> to vector<8x1xi1>
      %295 = vector.broadcast %294 : vector<8x1xi1> to vector<8x128xi1>
      %296 = vector.broadcast %cst_86 : f32 to vector<8x128xf32>
      %297 = arith.select %295, %7, %296 : vector<8x128xi1>, vector<8x128xf32>
      %cst_87 = arith.constant dense<0xFF800000> : vector<128xf32>
      %298 = vector.multi_reduction <maximumf>, %297, %cst_87 [0] : vector<8x128xf32> to vector<128xf32>
      %299 = vector.shape_cast %298 : vector<128xf32> to vector<1x128xf32>
      %300 = vector.broadcast %299 : vector<1x128xf32> to vector<8x128xf32>
      %301 = arith.cmpf oeq, %297, %300 : vector<8x128xf32>
      %cst_88 = arith.constant 8.000000e+00 : f32
      %302 = vector.shape_cast %11 : vector<8x1xf32> to vector<8x1xf32>
      %303 = vector.broadcast %302 : vector<8x1xf32> to vector<8x128xf32>
      %304 = vector.broadcast %cst_88 : f32 to vector<8x128xf32>
      %305 = arith.select %301, %303, %304 : vector<8x128xi1>, vector<8x128xf32>
      %cst_89 = arith.constant dense<0x7F800000> : vector<128xf32>
      %306 = vector.multi_reduction <minimumf>, %305, %cst_89 [0] : vector<8x128xf32> to vector<128xf32>
      %307 = vector.shape_cast %306 : vector<128xf32> to vector<1x128xf32>
      %308 = vector.broadcast %2 : f32 to vector<1x128xf32>
      %309 = arith.cmpf one, %307, %308 : vector<1x128xf32>
      %cst_90 = arith.constant 1.000000e+00 : f32
      %cst_91 = arith.constant 0.000000e+00 : f32
      %310 = vector.broadcast %cst_90 : f32 to vector<1x128xf32>
      %311 = vector.broadcast %cst_91 : f32 to vector<1x128xf32>
      %312 = arith.select %309, %310, %311 : vector<1x128xi1>, vector<1x128xf32>
      %313 = arith.mulf %232, %312 : vector<1x128xf32>
      %314 = vector.shape_cast %313 : vector<1x128xf32> to vector<1x1x128xf32>
      %cst_92 = arith.constant dense<0.000000e+00> : vector<1xf32>
      %315 = vector.multi_reduction <add>, %314, %cst_92 [1, 2] : vector<1x1x128xf32> to vector<1xf32>
      %316 = vector.shape_cast %315 : vector<1xf32> to vector<1x1x1xf32>
      %317 = vector.extract %316[0, 0, 0] : f32 from vector<1x1x1xf32>
      %318 = vector.broadcast %317 : f32 to vector<1x1xf32>
      %c0_i32_93 = arith.constant 0 : i32
      %319 = arith.cmpi sgt, %0, %c0_i32_93 : i32
      %cst_94 = arith.constant 8.000000e+00 : f32
      %320 = vector.broadcast %cst_94 : f32 to vector<1x1xf32>
      %321 = arith.select %319, %320, %318 : vector<1x1xf32>
      %c0_i32_95 = arith.constant 0 : i32
      %322 = arith.cmpi sgt, %0, %c0_i32_95 : i32
      %cst_96 = arith.constant 1.000000e+00 : f32
      %323 = vector.broadcast %cst_96 : f32 to vector<1x128xf32>
      %324 = arith.subf %323, %6 : vector<1x128xf32>
      %325 = arith.mulf %24, %324 : vector<1x128xf32>
      %326 = arith.select %322, %24, %325 : vector<1x128xf32>
      %cst_97 = arith.constant 0.000000e+00 : f32
      %327 = vector.broadcast %cst_97 : f32 to vector<1x128xf32>
      %328 = vector.shape_cast %326 : vector<1x128xf32> to vector<1x1x128xf32>
      %cst_98 = arith.constant dense<0xFF800000> : vector<1xf32>
      %329 = vector.multi_reduction <maximumf>, %328, %cst_98 [1, 2] : vector<1x1x128xf32> to vector<1xf32>
      %330 = vector.shape_cast %329 : vector<1xf32> to vector<1x1x1xf32>
      %331 = vector.extract %330[0, 0, 0] : f32 from vector<1x1x1xf32>
      %332 = vector.broadcast %331 : f32 to vector<1x1xf32>
      %333 = vector.broadcast %332 : vector<1x1xf32> to vector<1x128xf32>
      %334 = arith.cmpf oeq, %326, %333 : vector<1x128xf32>
      %cst_99 = arith.constant 1.280000e+02 : f32
      %335 = vector.broadcast %cst_99 : f32 to vector<1x128xf32>
      %336 = arith.select %334, %9, %335 : vector<1x128xi1>, vector<1x128xf32>
      %337 = vector.shape_cast %336 : vector<1x128xf32> to vector<1x1x128xf32>
      %cst_100 = arith.constant dense<0x7F800000> : vector<1xf32>
      %338 = vector.multi_reduction <minimumf>, %337, %cst_100 [1, 2] : vector<1x1x128xf32> to vector<1xf32>
      %339 = vector.shape_cast %338 : vector<1xf32> to vector<1x1x1xf32>
      %340 = vector.extract %339[0, 0, 0] : f32 from vector<1x1x1xf32>
      %341 = vector.broadcast %340 : f32 to vector<1x1xf32>
      %342 = vector.broadcast %341 : vector<1x1xf32> to vector<1x128xf32>
      %343 = arith.cmpf oeq, %9, %342 : vector<1x128xf32>
      %cst_101 = arith.constant 0.000000e+00 : f32
      %344 = vector.broadcast %cst_101 : f32 to vector<1x1xf32>
      %345 = arith.cmpf ogt, %332, %344 : vector<1x1xf32>
      %346 = vector.broadcast %345 : vector<1x1xi1> to vector<1x128xi1>
      %347 = arith.andi %343, %346 : vector<1x128xi1>
      %cst_102 = arith.constant 0.000000e+00 : f32
      %348 = vector.broadcast %cst_102 : f32 to vector<1x1xf32>
      %349 = arith.cmpf ogt, %321, %348 : vector<1x1xf32>
      %350 = vector.broadcast %349 : vector<1x1xi1> to vector<1x128xi1>
      %351 = arith.andi %347, %350 : vector<1x128xi1>
      %cst_103 = arith.constant 1.000000e+00 : f32
      %352 = vector.broadcast %cst_103 : f32 to vector<1x128xf32>
      %353 = arith.select %351, %352, %327 : vector<1x128xi1>, vector<1x128xf32>
      %cst_104 = arith.constant 0.000000e+00 : f32
      %354 = vector.broadcast %cst_104 : f32 to vector<1x128xf32>
      %355 = arith.select %351, %354, %326 : vector<1x128xi1>, vector<1x128xf32>
      %356 = vector.shape_cast %355 : vector<1x128xf32> to vector<1x1x128xf32>
      %cst_105 = arith.constant dense<0xFF800000> : vector<1xf32>
      %357 = vector.multi_reduction <maximumf>, %356, %cst_105 [1, 2] : vector<1x1x128xf32> to vector<1xf32>
      %358 = vector.shape_cast %357 : vector<1xf32> to vector<1x1x1xf32>
      %359 = vector.extract %358[0, 0, 0] : f32 from vector<1x1x1xf32>
      %360 = vector.broadcast %359 : f32 to vector<1x1xf32>
      %361 = vector.broadcast %360 : vector<1x1xf32> to vector<1x128xf32>
      %362 = arith.cmpf oeq, %355, %361 : vector<1x128xf32>
      %cst_106 = arith.constant 1.280000e+02 : f32
      %363 = vector.broadcast %cst_106 : f32 to vector<1x128xf32>
      %364 = arith.select %362, %9, %363 : vector<1x128xi1>, vector<1x128xf32>
      %365 = vector.shape_cast %364 : vector<1x128xf32> to vector<1x1x128xf32>
      %cst_107 = arith.constant dense<0x7F800000> : vector<1xf32>
      %366 = vector.multi_reduction <minimumf>, %365, %cst_107 [1, 2] : vector<1x1x128xf32> to vector<1xf32>
      %367 = vector.shape_cast %366 : vector<1xf32> to vector<1x1x1xf32>
      %368 = vector.extract %367[0, 0, 0] : f32 from vector<1x1x1xf32>
      %369 = vector.broadcast %368 : f32 to vector<1x1xf32>
      %370 = vector.broadcast %369 : vector<1x1xf32> to vector<1x128xf32>
      %371 = arith.cmpf oeq, %9, %370 : vector<1x128xf32>
      %cst_108 = arith.constant 0.000000e+00 : f32
      %372 = vector.broadcast %cst_108 : f32 to vector<1x1xf32>
      %373 = arith.cmpf ogt, %360, %372 : vector<1x1xf32>
      %374 = vector.broadcast %373 : vector<1x1xi1> to vector<1x128xi1>
      %375 = arith.andi %371, %374 : vector<1x128xi1>
      %cst_109 = arith.constant 1.000000e+00 : f32
      %376 = vector.broadcast %cst_109 : f32 to vector<1x1xf32>
      %377 = arith.cmpf ogt, %321, %376 : vector<1x1xf32>
      %378 = vector.broadcast %377 : vector<1x1xi1> to vector<1x128xi1>
      %379 = arith.andi %375, %378 : vector<1x128xi1>
      %cst_110 = arith.constant 1.000000e+00 : f32
      %380 = vector.broadcast %cst_110 : f32 to vector<1x128xf32>
      %381 = arith.select %379, %380, %353 : vector<1x128xi1>, vector<1x128xf32>
      %cst_111 = arith.constant 0.000000e+00 : f32
      %382 = vector.broadcast %cst_111 : f32 to vector<1x128xf32>
      %383 = arith.select %379, %382, %355 : vector<1x128xi1>, vector<1x128xf32>
      %384 = vector.shape_cast %383 : vector<1x128xf32> to vector<1x1x128xf32>
      %cst_112 = arith.constant dense<0xFF800000> : vector<1xf32>
      %385 = vector.multi_reduction <maximumf>, %384, %cst_112 [1, 2] : vector<1x1x128xf32> to vector<1xf32>
      %386 = vector.shape_cast %385 : vector<1xf32> to vector<1x1x1xf32>
      %387 = vector.extract %386[0, 0, 0] : f32 from vector<1x1x1xf32>
      %388 = vector.broadcast %387 : f32 to vector<1x1xf32>
      %389 = vector.broadcast %388 : vector<1x1xf32> to vector<1x128xf32>
      %390 = arith.cmpf oeq, %383, %389 : vector<1x128xf32>
      %cst_113 = arith.constant 1.280000e+02 : f32
      %391 = vector.broadcast %cst_113 : f32 to vector<1x128xf32>
      %392 = arith.select %390, %9, %391 : vector<1x128xi1>, vector<1x128xf32>
      %393 = vector.shape_cast %392 : vector<1x128xf32> to vector<1x1x128xf32>
      %cst_114 = arith.constant dense<0x7F800000> : vector<1xf32>
      %394 = vector.multi_reduction <minimumf>, %393, %cst_114 [1, 2] : vector<1x1x128xf32> to vector<1xf32>
      %395 = vector.shape_cast %394 : vector<1xf32> to vector<1x1x1xf32>
      %396 = vector.extract %395[0, 0, 0] : f32 from vector<1x1x1xf32>
      %397 = vector.broadcast %396 : f32 to vector<1x1xf32>
      %398 = vector.broadcast %397 : vector<1x1xf32> to vector<1x128xf32>
      %399 = arith.cmpf oeq, %9, %398 : vector<1x128xf32>
      %cst_115 = arith.constant 0.000000e+00 : f32
      %400 = vector.broadcast %cst_115 : f32 to vector<1x1xf32>
      %401 = arith.cmpf ogt, %388, %400 : vector<1x1xf32>
      %402 = vector.broadcast %401 : vector<1x1xi1> to vector<1x128xi1>
      %403 = arith.andi %399, %402 : vector<1x128xi1>
      %cst_116 = arith.constant 2.000000e+00 : f32
      %404 = vector.broadcast %cst_116 : f32 to vector<1x1xf32>
      %405 = arith.cmpf ogt, %321, %404 : vector<1x1xf32>
      %406 = vector.broadcast %405 : vector<1x1xi1> to vector<1x128xi1>
      %407 = arith.andi %403, %406 : vector<1x128xi1>
      %cst_117 = arith.constant 1.000000e+00 : f32
      %408 = vector.broadcast %cst_117 : f32 to vector<1x128xf32>
      %409 = arith.select %407, %408, %381 : vector<1x128xi1>, vector<1x128xf32>
      %cst_118 = arith.constant 0.000000e+00 : f32
      %410 = vector.broadcast %cst_118 : f32 to vector<1x128xf32>
      %411 = arith.select %407, %410, %383 : vector<1x128xi1>, vector<1x128xf32>
      %412 = vector.shape_cast %411 : vector<1x128xf32> to vector<1x1x128xf32>
      %cst_119 = arith.constant dense<0xFF800000> : vector<1xf32>
      %413 = vector.multi_reduction <maximumf>, %412, %cst_119 [1, 2] : vector<1x1x128xf32> to vector<1xf32>
      %414 = vector.shape_cast %413 : vector<1xf32> to vector<1x1x1xf32>
      %415 = vector.extract %414[0, 0, 0] : f32 from vector<1x1x1xf32>
      %416 = vector.broadcast %415 : f32 to vector<1x1xf32>
      %417 = vector.broadcast %416 : vector<1x1xf32> to vector<1x128xf32>
      %418 = arith.cmpf oeq, %411, %417 : vector<1x128xf32>
      %cst_120 = arith.constant 1.280000e+02 : f32
      %419 = vector.broadcast %cst_120 : f32 to vector<1x128xf32>
      %420 = arith.select %418, %9, %419 : vector<1x128xi1>, vector<1x128xf32>
      %421 = vector.shape_cast %420 : vector<1x128xf32> to vector<1x1x128xf32>
      %cst_121 = arith.constant dense<0x7F800000> : vector<1xf32>
      %422 = vector.multi_reduction <minimumf>, %421, %cst_121 [1, 2] : vector<1x1x128xf32> to vector<1xf32>
      %423 = vector.shape_cast %422 : vector<1xf32> to vector<1x1x1xf32>
      %424 = vector.extract %423[0, 0, 0] : f32 from vector<1x1x1xf32>
      %425 = vector.broadcast %424 : f32 to vector<1x1xf32>
      %426 = vector.broadcast %425 : vector<1x1xf32> to vector<1x128xf32>
      %427 = arith.cmpf oeq, %9, %426 : vector<1x128xf32>
      %cst_122 = arith.constant 0.000000e+00 : f32
      %428 = vector.broadcast %cst_122 : f32 to vector<1x1xf32>
      %429 = arith.cmpf ogt, %416, %428 : vector<1x1xf32>
      %430 = vector.broadcast %429 : vector<1x1xi1> to vector<1x128xi1>
      %431 = arith.andi %427, %430 : vector<1x128xi1>
      %cst_123 = arith.constant 3.000000e+00 : f32
      %432 = vector.broadcast %cst_123 : f32 to vector<1x1xf32>
      %433 = arith.cmpf ogt, %321, %432 : vector<1x1xf32>
      %434 = vector.broadcast %433 : vector<1x1xi1> to vector<1x128xi1>
      %435 = arith.andi %431, %434 : vector<1x128xi1>
      %cst_124 = arith.constant 1.000000e+00 : f32
      %436 = vector.broadcast %cst_124 : f32 to vector<1x128xf32>
      %437 = arith.select %435, %436, %409 : vector<1x128xi1>, vector<1x128xf32>
      %cst_125 = arith.constant 0.000000e+00 : f32
      %438 = vector.broadcast %cst_125 : f32 to vector<1x128xf32>
      %439 = arith.select %435, %438, %411 : vector<1x128xi1>, vector<1x128xf32>
      %440 = vector.shape_cast %439 : vector<1x128xf32> to vector<1x1x128xf32>
      %cst_126 = arith.constant dense<0xFF800000> : vector<1xf32>
      %441 = vector.multi_reduction <maximumf>, %440, %cst_126 [1, 2] : vector<1x1x128xf32> to vector<1xf32>
      %442 = vector.shape_cast %441 : vector<1xf32> to vector<1x1x1xf32>
      %443 = vector.extract %442[0, 0, 0] : f32 from vector<1x1x1xf32>
      %444 = vector.broadcast %443 : f32 to vector<1x1xf32>
      %445 = vector.broadcast %444 : vector<1x1xf32> to vector<1x128xf32>
      %446 = arith.cmpf oeq, %439, %445 : vector<1x128xf32>
      %cst_127 = arith.constant 1.280000e+02 : f32
      %447 = vector.broadcast %cst_127 : f32 to vector<1x128xf32>
      %448 = arith.select %446, %9, %447 : vector<1x128xi1>, vector<1x128xf32>
      %449 = vector.shape_cast %448 : vector<1x128xf32> to vector<1x1x128xf32>
      %cst_128 = arith.constant dense<0x7F800000> : vector<1xf32>
      %450 = vector.multi_reduction <minimumf>, %449, %cst_128 [1, 2] : vector<1x1x128xf32> to vector<1xf32>
      %451 = vector.shape_cast %450 : vector<1xf32> to vector<1x1x1xf32>
      %452 = vector.extract %451[0, 0, 0] : f32 from vector<1x1x1xf32>
      %453 = vector.broadcast %452 : f32 to vector<1x1xf32>
      %454 = vector.broadcast %453 : vector<1x1xf32> to vector<1x128xf32>
      %455 = arith.cmpf oeq, %9, %454 : vector<1x128xf32>
      %cst_129 = arith.constant 0.000000e+00 : f32
      %456 = vector.broadcast %cst_129 : f32 to vector<1x1xf32>
      %457 = arith.cmpf ogt, %444, %456 : vector<1x1xf32>
      %458 = vector.broadcast %457 : vector<1x1xi1> to vector<1x128xi1>
      %459 = arith.andi %455, %458 : vector<1x128xi1>
      %cst_130 = arith.constant 4.000000e+00 : f32
      %460 = vector.broadcast %cst_130 : f32 to vector<1x1xf32>
      %461 = arith.cmpf ogt, %321, %460 : vector<1x1xf32>
      %462 = vector.broadcast %461 : vector<1x1xi1> to vector<1x128xi1>
      %463 = arith.andi %459, %462 : vector<1x128xi1>
      %cst_131 = arith.constant 1.000000e+00 : f32
      %464 = vector.broadcast %cst_131 : f32 to vector<1x128xf32>
      %465 = arith.select %463, %464, %437 : vector<1x128xi1>, vector<1x128xf32>
      %cst_132 = arith.constant 0.000000e+00 : f32
      %466 = vector.broadcast %cst_132 : f32 to vector<1x128xf32>
      %467 = arith.select %463, %466, %439 : vector<1x128xi1>, vector<1x128xf32>
      %468 = vector.shape_cast %467 : vector<1x128xf32> to vector<1x1x128xf32>
      %cst_133 = arith.constant dense<0xFF800000> : vector<1xf32>
      %469 = vector.multi_reduction <maximumf>, %468, %cst_133 [1, 2] : vector<1x1x128xf32> to vector<1xf32>
      %470 = vector.shape_cast %469 : vector<1xf32> to vector<1x1x1xf32>
      %471 = vector.extract %470[0, 0, 0] : f32 from vector<1x1x1xf32>
      %472 = vector.broadcast %471 : f32 to vector<1x1xf32>
      %473 = vector.broadcast %472 : vector<1x1xf32> to vector<1x128xf32>
      %474 = arith.cmpf oeq, %467, %473 : vector<1x128xf32>
      %cst_134 = arith.constant 1.280000e+02 : f32
      %475 = vector.broadcast %cst_134 : f32 to vector<1x128xf32>
      %476 = arith.select %474, %9, %475 : vector<1x128xi1>, vector<1x128xf32>
      %477 = vector.shape_cast %476 : vector<1x128xf32> to vector<1x1x128xf32>
      %cst_135 = arith.constant dense<0x7F800000> : vector<1xf32>
      %478 = vector.multi_reduction <minimumf>, %477, %cst_135 [1, 2] : vector<1x1x128xf32> to vector<1xf32>
      %479 = vector.shape_cast %478 : vector<1xf32> to vector<1x1x1xf32>
      %480 = vector.extract %479[0, 0, 0] : f32 from vector<1x1x1xf32>
      %481 = vector.broadcast %480 : f32 to vector<1x1xf32>
      %482 = vector.broadcast %481 : vector<1x1xf32> to vector<1x128xf32>
      %483 = arith.cmpf oeq, %9, %482 : vector<1x128xf32>
      %cst_136 = arith.constant 0.000000e+00 : f32
      %484 = vector.broadcast %cst_136 : f32 to vector<1x1xf32>
      %485 = arith.cmpf ogt, %472, %484 : vector<1x1xf32>
      %486 = vector.broadcast %485 : vector<1x1xi1> to vector<1x128xi1>
      %487 = arith.andi %483, %486 : vector<1x128xi1>
      %cst_137 = arith.constant 5.000000e+00 : f32
      %488 = vector.broadcast %cst_137 : f32 to vector<1x1xf32>
      %489 = arith.cmpf ogt, %321, %488 : vector<1x1xf32>
      %490 = vector.broadcast %489 : vector<1x1xi1> to vector<1x128xi1>
      %491 = arith.andi %487, %490 : vector<1x128xi1>
      %cst_138 = arith.constant 1.000000e+00 : f32
      %492 = vector.broadcast %cst_138 : f32 to vector<1x128xf32>
      %493 = arith.select %491, %492, %465 : vector<1x128xi1>, vector<1x128xf32>
      %cst_139 = arith.constant 0.000000e+00 : f32
      %494 = vector.broadcast %cst_139 : f32 to vector<1x128xf32>
      %495 = arith.select %491, %494, %467 : vector<1x128xi1>, vector<1x128xf32>
      %496 = vector.shape_cast %495 : vector<1x128xf32> to vector<1x1x128xf32>
      %cst_140 = arith.constant dense<0xFF800000> : vector<1xf32>
      %497 = vector.multi_reduction <maximumf>, %496, %cst_140 [1, 2] : vector<1x1x128xf32> to vector<1xf32>
      %498 = vector.shape_cast %497 : vector<1xf32> to vector<1x1x1xf32>
      %499 = vector.extract %498[0, 0, 0] : f32 from vector<1x1x1xf32>
      %500 = vector.broadcast %499 : f32 to vector<1x1xf32>
      %501 = vector.broadcast %500 : vector<1x1xf32> to vector<1x128xf32>
      %502 = arith.cmpf oeq, %495, %501 : vector<1x128xf32>
      %cst_141 = arith.constant 1.280000e+02 : f32
      %503 = vector.broadcast %cst_141 : f32 to vector<1x128xf32>
      %504 = arith.select %502, %9, %503 : vector<1x128xi1>, vector<1x128xf32>
      %505 = vector.shape_cast %504 : vector<1x128xf32> to vector<1x1x128xf32>
      %cst_142 = arith.constant dense<0x7F800000> : vector<1xf32>
      %506 = vector.multi_reduction <minimumf>, %505, %cst_142 [1, 2] : vector<1x1x128xf32> to vector<1xf32>
      %507 = vector.shape_cast %506 : vector<1xf32> to vector<1x1x1xf32>
      %508 = vector.extract %507[0, 0, 0] : f32 from vector<1x1x1xf32>
      %509 = vector.broadcast %508 : f32 to vector<1x1xf32>
      %510 = vector.broadcast %509 : vector<1x1xf32> to vector<1x128xf32>
      %511 = arith.cmpf oeq, %9, %510 : vector<1x128xf32>
      %cst_143 = arith.constant 0.000000e+00 : f32
      %512 = vector.broadcast %cst_143 : f32 to vector<1x1xf32>
      %513 = arith.cmpf ogt, %500, %512 : vector<1x1xf32>
      %514 = vector.broadcast %513 : vector<1x1xi1> to vector<1x128xi1>
      %515 = arith.andi %511, %514 : vector<1x128xi1>
      %cst_144 = arith.constant 6.000000e+00 : f32
      %516 = vector.broadcast %cst_144 : f32 to vector<1x1xf32>
      %517 = arith.cmpf ogt, %321, %516 : vector<1x1xf32>
      %518 = vector.broadcast %517 : vector<1x1xi1> to vector<1x128xi1>
      %519 = arith.andi %515, %518 : vector<1x128xi1>
      %cst_145 = arith.constant 1.000000e+00 : f32
      %520 = vector.broadcast %cst_145 : f32 to vector<1x128xf32>
      %521 = arith.select %519, %520, %493 : vector<1x128xi1>, vector<1x128xf32>
      %cst_146 = arith.constant 0.000000e+00 : f32
      %522 = vector.broadcast %cst_146 : f32 to vector<1x128xf32>
      %523 = arith.select %519, %522, %495 : vector<1x128xi1>, vector<1x128xf32>
      %524 = vector.shape_cast %523 : vector<1x128xf32> to vector<1x1x128xf32>
      %cst_147 = arith.constant dense<0xFF800000> : vector<1xf32>
      %525 = vector.multi_reduction <maximumf>, %524, %cst_147 [1, 2] : vector<1x1x128xf32> to vector<1xf32>
      %526 = vector.shape_cast %525 : vector<1xf32> to vector<1x1x1xf32>
      %527 = vector.extract %526[0, 0, 0] : f32 from vector<1x1x1xf32>
      %528 = vector.broadcast %527 : f32 to vector<1x1xf32>
      %529 = vector.broadcast %528 : vector<1x1xf32> to vector<1x128xf32>
      %530 = arith.cmpf oeq, %523, %529 : vector<1x128xf32>
      %cst_148 = arith.constant 1.280000e+02 : f32
      %531 = vector.broadcast %cst_148 : f32 to vector<1x128xf32>
      %532 = arith.select %530, %9, %531 : vector<1x128xi1>, vector<1x128xf32>
      %533 = vector.shape_cast %532 : vector<1x128xf32> to vector<1x1x128xf32>
      %cst_149 = arith.constant dense<0x7F800000> : vector<1xf32>
      %534 = vector.multi_reduction <minimumf>, %533, %cst_149 [1, 2] : vector<1x1x128xf32> to vector<1xf32>
      %535 = vector.shape_cast %534 : vector<1xf32> to vector<1x1x1xf32>
      %536 = vector.extract %535[0, 0, 0] : f32 from vector<1x1x1xf32>
      %537 = vector.broadcast %536 : f32 to vector<1x1xf32>
      %538 = vector.broadcast %537 : vector<1x1xf32> to vector<1x128xf32>
      %539 = arith.cmpf oeq, %9, %538 : vector<1x128xf32>
      %cst_150 = arith.constant 0.000000e+00 : f32
      %540 = vector.broadcast %cst_150 : f32 to vector<1x1xf32>
      %541 = arith.cmpf ogt, %528, %540 : vector<1x1xf32>
      %542 = vector.broadcast %541 : vector<1x1xi1> to vector<1x128xi1>
      %543 = arith.andi %539, %542 : vector<1x128xi1>
      %cst_151 = arith.constant 7.000000e+00 : f32
      %544 = vector.broadcast %cst_151 : f32 to vector<1x1xf32>
      %545 = arith.cmpf ogt, %321, %544 : vector<1x1xf32>
      %546 = vector.broadcast %545 : vector<1x1xi1> to vector<1x128xi1>
      %547 = arith.andi %543, %546 : vector<1x128xi1>
      %cst_152 = arith.constant 1.000000e+00 : f32
      %548 = vector.broadcast %cst_152 : f32 to vector<1x128xf32>
      %549 = arith.select %547, %548, %521 : vector<1x128xi1>, vector<1x128xf32>
      %550 = arith.maximumf %6, %549 : vector<1x128xf32>
      %cst_153 = arith.constant 0.000000e+00 : f32
      %551 = vector.broadcast %cst_153 : f32 to vector<1x128xf32>
      %552 = arith.cmpf ogt, %549, %551 : vector<1x128xf32>
      %553 = vector.shape_cast %552 : vector<1x128xi1> to vector<1x128xi1>
      %554 = vector.broadcast %553 : vector<1x128xi1> to vector<8x128xi1>
      %555 = vector.shape_cast %3 : vector<8x1xf32> to vector<8x1xf32>
      %556 = vector.broadcast %555 : vector<8x1xf32> to vector<8x128xf32>
      %557 = arith.select %554, %556, %4 : vector<8x128xi1>, vector<8x128xf32>
      %558 = vector.broadcast %3 : vector<8x1xf32> to vector<8x128xf32>
      %559 = arith.subf %558, %557 : vector<8x128xf32>
      %560 = math.absf %559 : vector<8x128xf32>
      %561 = vector.broadcast %5 : vector<8x1xf32> to vector<8x128xf32>
      %562 = arith.mulf %561, %560 : vector<8x128xf32>
      %cst_154 = arith.constant dense<0.000000e+00> : vector<128xf32>
      %563 = vector.multi_reduction <add>, %562, %cst_154 [0] : vector<8x128xf32> to vector<128xf32>
      %564 = vector.shape_cast %563 : vector<128xf32> to vector<1x128xf32>
      %cst_155 = arith.constant -1.000000e+00 : f32
      %565 = vector.broadcast %cst_155 : f32 to vector<1x128xf32>
      %566 = arith.mulf %565, %564 : vector<1x128xf32>
      %567 = math.exp %566 : vector<1x128xf32>
      %568 = arith.mulf %567, %550 : vector<1x128xf32>
      %cst_156 = arith.constant 0.000000e+00 : f32
      %569 = vector.broadcast %cst_156 : f32 to vector<1x128xf32>
      %570 = vector.shape_cast %568 : vector<1x128xf32> to vector<1x1x128xf32>
      %cst_157 = arith.constant dense<0xFF800000> : vector<1xf32>
      %571 = vector.multi_reduction <maximumf>, %570, %cst_157 [1, 2] : vector<1x1x128xf32> to vector<1xf32>
      %572 = vector.shape_cast %571 : vector<1xf32> to vector<1x1x1xf32>
      %573 = vector.extract %572[0, 0, 0] : f32 from vector<1x1x1xf32>
      %574 = vector.broadcast %573 : f32 to vector<1x1xf32>
      %575 = vector.broadcast %574 : vector<1x1xf32> to vector<1x128xf32>
      %576 = arith.cmpf oeq, %568, %575 : vector<1x128xf32>
      %cst_158 = arith.constant 1.280000e+02 : f32
      %577 = vector.broadcast %cst_158 : f32 to vector<1x128xf32>
      %578 = arith.select %576, %9, %577 : vector<1x128xi1>, vector<1x128xf32>
      %579 = vector.shape_cast %578 : vector<1x128xf32> to vector<1x1x128xf32>
      %cst_159 = arith.constant dense<0x7F800000> : vector<1xf32>
      %580 = vector.multi_reduction <minimumf>, %579, %cst_159 [1, 2] : vector<1x1x128xf32> to vector<1xf32>
      %581 = vector.shape_cast %580 : vector<1xf32> to vector<1x1x1xf32>
      %582 = vector.extract %581[0, 0, 0] : f32 from vector<1x1x1xf32>
      %583 = vector.broadcast %582 : f32 to vector<1x1xf32>
      %584 = vector.broadcast %583 : vector<1x1xf32> to vector<1x128xf32>
      %585 = arith.cmpf oeq, %9, %584 : vector<1x128xf32>
      %cst_160 = arith.constant 0.000000e+00 : f32
      %586 = vector.broadcast %cst_160 : f32 to vector<1x1xf32>
      %587 = arith.cmpf ogt, %574, %586 : vector<1x1xf32>
      %588 = vector.broadcast %587 : vector<1x1xi1> to vector<1x128xi1>
      %589 = arith.andi %585, %588 : vector<1x128xi1>
      %true_161 = arith.constant true
      %590 = vector.broadcast %true_161 : i1 to vector<1x128xi1>
      %591 = arith.andi %589, %590 : vector<1x128xi1>
      %cst_162 = arith.constant 1.000000e+00 : f32
      %592 = vector.broadcast %cst_162 : f32 to vector<1x128xf32>
      %593 = arith.select %591, %592, %569 : vector<1x128xi1>, vector<1x128xf32>
      %cst_163 = arith.constant 0.000000e+00 : f32
      %594 = vector.broadcast %cst_163 : f32 to vector<1x128xf32>
      %595 = arith.select %591, %594, %568 : vector<1x128xi1>, vector<1x128xf32>
      %596 = vector.shape_cast %595 : vector<1x128xf32> to vector<1x1x128xf32>
      %cst_164 = arith.constant dense<0xFF800000> : vector<1xf32>
      %597 = vector.multi_reduction <maximumf>, %596, %cst_164 [1, 2] : vector<1x1x128xf32> to vector<1xf32>
      %598 = vector.shape_cast %597 : vector<1xf32> to vector<1x1x1xf32>
      %599 = vector.extract %598[0, 0, 0] : f32 from vector<1x1x1xf32>
      %600 = vector.broadcast %599 : f32 to vector<1x1xf32>
      %601 = vector.broadcast %600 : vector<1x1xf32> to vector<1x128xf32>
      %602 = arith.cmpf oeq, %595, %601 : vector<1x128xf32>
      %cst_165 = arith.constant 1.280000e+02 : f32
      %603 = vector.broadcast %cst_165 : f32 to vector<1x128xf32>
      %604 = arith.select %602, %9, %603 : vector<1x128xi1>, vector<1x128xf32>
      %605 = vector.shape_cast %604 : vector<1x128xf32> to vector<1x1x128xf32>
      %cst_166 = arith.constant dense<0x7F800000> : vector<1xf32>
      %606 = vector.multi_reduction <minimumf>, %605, %cst_166 [1, 2] : vector<1x1x128xf32> to vector<1xf32>
      %607 = vector.shape_cast %606 : vector<1xf32> to vector<1x1x1xf32>
      %608 = vector.extract %607[0, 0, 0] : f32 from vector<1x1x1xf32>
      %609 = vector.broadcast %608 : f32 to vector<1x1xf32>
      %610 = vector.broadcast %609 : vector<1x1xf32> to vector<1x128xf32>
      %611 = arith.cmpf oeq, %9, %610 : vector<1x128xf32>
      %cst_167 = arith.constant 0.000000e+00 : f32
      %612 = vector.broadcast %cst_167 : f32 to vector<1x1xf32>
      %613 = arith.cmpf ogt, %600, %612 : vector<1x1xf32>
      %614 = vector.broadcast %613 : vector<1x1xi1> to vector<1x128xi1>
      %615 = arith.andi %611, %614 : vector<1x128xi1>
      %true_168 = arith.constant true
      %616 = vector.broadcast %true_168 : i1 to vector<1x128xi1>
      %617 = arith.andi %615, %616 : vector<1x128xi1>
      %cst_169 = arith.constant 1.000000e+00 : f32
      %618 = vector.broadcast %cst_169 : f32 to vector<1x128xf32>
      %619 = arith.select %617, %618, %593 : vector<1x128xi1>, vector<1x128xf32>
      %cst_170 = arith.constant 0.000000e+00 : f32
      %620 = vector.broadcast %cst_170 : f32 to vector<1x128xf32>
      %621 = arith.select %617, %620, %595 : vector<1x128xi1>, vector<1x128xf32>
      %622 = vector.shape_cast %621 : vector<1x128xf32> to vector<1x1x128xf32>
      %cst_171 = arith.constant dense<0xFF800000> : vector<1xf32>
      %623 = vector.multi_reduction <maximumf>, %622, %cst_171 [1, 2] : vector<1x1x128xf32> to vector<1xf32>
      %624 = vector.shape_cast %623 : vector<1xf32> to vector<1x1x1xf32>
      %625 = vector.extract %624[0, 0, 0] : f32 from vector<1x1x1xf32>
      %626 = vector.broadcast %625 : f32 to vector<1x1xf32>
      %627 = vector.broadcast %626 : vector<1x1xf32> to vector<1x128xf32>
      %628 = arith.cmpf oeq, %621, %627 : vector<1x128xf32>
      %cst_172 = arith.constant 1.280000e+02 : f32
      %629 = vector.broadcast %cst_172 : f32 to vector<1x128xf32>
      %630 = arith.select %628, %9, %629 : vector<1x128xi1>, vector<1x128xf32>
      %631 = vector.shape_cast %630 : vector<1x128xf32> to vector<1x1x128xf32>
      %cst_173 = arith.constant dense<0x7F800000> : vector<1xf32>
      %632 = vector.multi_reduction <minimumf>, %631, %cst_173 [1, 2] : vector<1x1x128xf32> to vector<1xf32>
      %633 = vector.shape_cast %632 : vector<1xf32> to vector<1x1x1xf32>
      %634 = vector.extract %633[0, 0, 0] : f32 from vector<1x1x1xf32>
      %635 = vector.broadcast %634 : f32 to vector<1x1xf32>
      %636 = vector.broadcast %635 : vector<1x1xf32> to vector<1x128xf32>
      %637 = arith.cmpf oeq, %9, %636 : vector<1x128xf32>
      %cst_174 = arith.constant 0.000000e+00 : f32
      %638 = vector.broadcast %cst_174 : f32 to vector<1x1xf32>
      %639 = arith.cmpf ogt, %626, %638 : vector<1x1xf32>
      %640 = vector.broadcast %639 : vector<1x1xi1> to vector<1x128xi1>
      %641 = arith.andi %637, %640 : vector<1x128xi1>
      %true_175 = arith.constant true
      %642 = vector.broadcast %true_175 : i1 to vector<1x128xi1>
      %643 = arith.andi %641, %642 : vector<1x128xi1>
      %cst_176 = arith.constant 1.000000e+00 : f32
      %644 = vector.broadcast %cst_176 : f32 to vector<1x128xf32>
      %645 = arith.select %643, %644, %619 : vector<1x128xi1>, vector<1x128xf32>
      %cst_177 = arith.constant 0.000000e+00 : f32
      %646 = vector.broadcast %cst_177 : f32 to vector<1x128xf32>
      %647 = arith.select %643, %646, %621 : vector<1x128xi1>, vector<1x128xf32>
      %648 = vector.shape_cast %647 : vector<1x128xf32> to vector<1x1x128xf32>
      %cst_178 = arith.constant dense<0xFF800000> : vector<1xf32>
      %649 = vector.multi_reduction <maximumf>, %648, %cst_178 [1, 2] : vector<1x1x128xf32> to vector<1xf32>
      %650 = vector.shape_cast %649 : vector<1xf32> to vector<1x1x1xf32>
      %651 = vector.extract %650[0, 0, 0] : f32 from vector<1x1x1xf32>
      %652 = vector.broadcast %651 : f32 to vector<1x1xf32>
      %653 = vector.broadcast %652 : vector<1x1xf32> to vector<1x128xf32>
      %654 = arith.cmpf oeq, %647, %653 : vector<1x128xf32>
      %cst_179 = arith.constant 1.280000e+02 : f32
      %655 = vector.broadcast %cst_179 : f32 to vector<1x128xf32>
      %656 = arith.select %654, %9, %655 : vector<1x128xi1>, vector<1x128xf32>
      %657 = vector.shape_cast %656 : vector<1x128xf32> to vector<1x1x128xf32>
      %cst_180 = arith.constant dense<0x7F800000> : vector<1xf32>
      %658 = vector.multi_reduction <minimumf>, %657, %cst_180 [1, 2] : vector<1x1x128xf32> to vector<1xf32>
      %659 = vector.shape_cast %658 : vector<1xf32> to vector<1x1x1xf32>
      %660 = vector.extract %659[0, 0, 0] : f32 from vector<1x1x1xf32>
      %661 = vector.broadcast %660 : f32 to vector<1x1xf32>
      %662 = vector.broadcast %661 : vector<1x1xf32> to vector<1x128xf32>
      %663 = arith.cmpf oeq, %9, %662 : vector<1x128xf32>
      %cst_181 = arith.constant 0.000000e+00 : f32
      %664 = vector.broadcast %cst_181 : f32 to vector<1x1xf32>
      %665 = arith.cmpf ogt, %652, %664 : vector<1x1xf32>
      %666 = vector.broadcast %665 : vector<1x1xi1> to vector<1x128xi1>
      %667 = arith.andi %663, %666 : vector<1x128xi1>
      %true_182 = arith.constant true
      %668 = vector.broadcast %true_182 : i1 to vector<1x128xi1>
      %669 = arith.andi %667, %668 : vector<1x128xi1>
      %cst_183 = arith.constant 1.000000e+00 : f32
      %670 = vector.broadcast %cst_183 : f32 to vector<1x128xf32>
      %671 = arith.select %669, %670, %645 : vector<1x128xi1>, vector<1x128xf32>
      %cst_184 = arith.constant 0.000000e+00 : f32
      %672 = vector.broadcast %cst_184 : f32 to vector<1x128xf32>
      %673 = arith.select %669, %672, %647 : vector<1x128xi1>, vector<1x128xf32>
      %674 = vector.shape_cast %673 : vector<1x128xf32> to vector<1x1x128xf32>
      %cst_185 = arith.constant dense<0xFF800000> : vector<1xf32>
      %675 = vector.multi_reduction <maximumf>, %674, %cst_185 [1, 2] : vector<1x1x128xf32> to vector<1xf32>
      %676 = vector.shape_cast %675 : vector<1xf32> to vector<1x1x1xf32>
      %677 = vector.extract %676[0, 0, 0] : f32 from vector<1x1x1xf32>
      %678 = vector.broadcast %677 : f32 to vector<1x1xf32>
      %679 = vector.broadcast %678 : vector<1x1xf32> to vector<1x128xf32>
      %680 = arith.cmpf oeq, %673, %679 : vector<1x128xf32>
      %cst_186 = arith.constant 1.280000e+02 : f32
      %681 = vector.broadcast %cst_186 : f32 to vector<1x128xf32>
      %682 = arith.select %680, %9, %681 : vector<1x128xi1>, vector<1x128xf32>
      %683 = vector.shape_cast %682 : vector<1x128xf32> to vector<1x1x128xf32>
      %cst_187 = arith.constant dense<0x7F800000> : vector<1xf32>
      %684 = vector.multi_reduction <minimumf>, %683, %cst_187 [1, 2] : vector<1x1x128xf32> to vector<1xf32>
      %685 = vector.shape_cast %684 : vector<1xf32> to vector<1x1x1xf32>
      %686 = vector.extract %685[0, 0, 0] : f32 from vector<1x1x1xf32>
      %687 = vector.broadcast %686 : f32 to vector<1x1xf32>
      %688 = vector.broadcast %687 : vector<1x1xf32> to vector<1x128xf32>
      %689 = arith.cmpf oeq, %9, %688 : vector<1x128xf32>
      %cst_188 = arith.constant 0.000000e+00 : f32
      %690 = vector.broadcast %cst_188 : f32 to vector<1x1xf32>
      %691 = arith.cmpf ogt, %678, %690 : vector<1x1xf32>
      %692 = vector.broadcast %691 : vector<1x1xi1> to vector<1x128xi1>
      %693 = arith.andi %689, %692 : vector<1x128xi1>
      %true_189 = arith.constant true
      %694 = vector.broadcast %true_189 : i1 to vector<1x128xi1>
      %695 = arith.andi %693, %694 : vector<1x128xi1>
      %cst_190 = arith.constant 1.000000e+00 : f32
      %696 = vector.broadcast %cst_190 : f32 to vector<1x128xf32>
      %697 = arith.select %695, %696, %671 : vector<1x128xi1>, vector<1x128xf32>
      %cst_191 = arith.constant 0.000000e+00 : f32
      %698 = vector.broadcast %cst_191 : f32 to vector<1x128xf32>
      %699 = arith.select %695, %698, %673 : vector<1x128xi1>, vector<1x128xf32>
      %700 = vector.shape_cast %699 : vector<1x128xf32> to vector<1x1x128xf32>
      %cst_192 = arith.constant dense<0xFF800000> : vector<1xf32>
      %701 = vector.multi_reduction <maximumf>, %700, %cst_192 [1, 2] : vector<1x1x128xf32> to vector<1xf32>
      %702 = vector.shape_cast %701 : vector<1xf32> to vector<1x1x1xf32>
      %703 = vector.extract %702[0, 0, 0] : f32 from vector<1x1x1xf32>
      %704 = vector.broadcast %703 : f32 to vector<1x1xf32>
      %705 = vector.broadcast %704 : vector<1x1xf32> to vector<1x128xf32>
      %706 = arith.cmpf oeq, %699, %705 : vector<1x128xf32>
      %cst_193 = arith.constant 1.280000e+02 : f32
      %707 = vector.broadcast %cst_193 : f32 to vector<1x128xf32>
      %708 = arith.select %706, %9, %707 : vector<1x128xi1>, vector<1x128xf32>
      %709 = vector.shape_cast %708 : vector<1x128xf32> to vector<1x1x128xf32>
      %cst_194 = arith.constant dense<0x7F800000> : vector<1xf32>
      %710 = vector.multi_reduction <minimumf>, %709, %cst_194 [1, 2] : vector<1x1x128xf32> to vector<1xf32>
      %711 = vector.shape_cast %710 : vector<1xf32> to vector<1x1x1xf32>
      %712 = vector.extract %711[0, 0, 0] : f32 from vector<1x1x1xf32>
      %713 = vector.broadcast %712 : f32 to vector<1x1xf32>
      %714 = vector.broadcast %713 : vector<1x1xf32> to vector<1x128xf32>
      %715 = arith.cmpf oeq, %9, %714 : vector<1x128xf32>
      %cst_195 = arith.constant 0.000000e+00 : f32
      %716 = vector.broadcast %cst_195 : f32 to vector<1x1xf32>
      %717 = arith.cmpf ogt, %704, %716 : vector<1x1xf32>
      %718 = vector.broadcast %717 : vector<1x1xi1> to vector<1x128xi1>
      %719 = arith.andi %715, %718 : vector<1x128xi1>
      %true_196 = arith.constant true
      %720 = vector.broadcast %true_196 : i1 to vector<1x128xi1>
      %721 = arith.andi %719, %720 : vector<1x128xi1>
      %cst_197 = arith.constant 1.000000e+00 : f32
      %722 = vector.broadcast %cst_197 : f32 to vector<1x128xf32>
      %723 = arith.select %721, %722, %697 : vector<1x128xi1>, vector<1x128xf32>
      %cst_198 = arith.constant 0.000000e+00 : f32
      %724 = vector.broadcast %cst_198 : f32 to vector<1x128xf32>
      %725 = arith.select %721, %724, %699 : vector<1x128xi1>, vector<1x128xf32>
      %726 = vector.shape_cast %725 : vector<1x128xf32> to vector<1x1x128xf32>
      %cst_199 = arith.constant dense<0xFF800000> : vector<1xf32>
      %727 = vector.multi_reduction <maximumf>, %726, %cst_199 [1, 2] : vector<1x1x128xf32> to vector<1xf32>
      %728 = vector.shape_cast %727 : vector<1xf32> to vector<1x1x1xf32>
      %729 = vector.extract %728[0, 0, 0] : f32 from vector<1x1x1xf32>
      %730 = vector.broadcast %729 : f32 to vector<1x1xf32>
      %731 = vector.broadcast %730 : vector<1x1xf32> to vector<1x128xf32>
      %732 = arith.cmpf oeq, %725, %731 : vector<1x128xf32>
      %cst_200 = arith.constant 1.280000e+02 : f32
      %733 = vector.broadcast %cst_200 : f32 to vector<1x128xf32>
      %734 = arith.select %732, %9, %733 : vector<1x128xi1>, vector<1x128xf32>
      %735 = vector.shape_cast %734 : vector<1x128xf32> to vector<1x1x128xf32>
      %cst_201 = arith.constant dense<0x7F800000> : vector<1xf32>
      %736 = vector.multi_reduction <minimumf>, %735, %cst_201 [1, 2] : vector<1x1x128xf32> to vector<1xf32>
      %737 = vector.shape_cast %736 : vector<1xf32> to vector<1x1x1xf32>
      %738 = vector.extract %737[0, 0, 0] : f32 from vector<1x1x1xf32>
      %739 = vector.broadcast %738 : f32 to vector<1x1xf32>
      %740 = vector.broadcast %739 : vector<1x1xf32> to vector<1x128xf32>
      %741 = arith.cmpf oeq, %9, %740 : vector<1x128xf32>
      %cst_202 = arith.constant 0.000000e+00 : f32
      %742 = vector.broadcast %cst_202 : f32 to vector<1x1xf32>
      %743 = arith.cmpf ogt, %730, %742 : vector<1x1xf32>
      %744 = vector.broadcast %743 : vector<1x1xi1> to vector<1x128xi1>
      %745 = arith.andi %741, %744 : vector<1x128xi1>
      %true_203 = arith.constant true
      %746 = vector.broadcast %true_203 : i1 to vector<1x128xi1>
      %747 = arith.andi %745, %746 : vector<1x128xi1>
      %cst_204 = arith.constant 1.000000e+00 : f32
      %748 = vector.broadcast %cst_204 : f32 to vector<1x128xf32>
      %749 = arith.select %747, %748, %723 : vector<1x128xi1>, vector<1x128xf32>
      %cst_205 = arith.constant 0.000000e+00 : f32
      %750 = vector.broadcast %cst_205 : f32 to vector<1x128xf32>
      %751 = arith.select %747, %750, %725 : vector<1x128xi1>, vector<1x128xf32>
      %752 = vector.shape_cast %751 : vector<1x128xf32> to vector<1x1x128xf32>
      %cst_206 = arith.constant dense<0xFF800000> : vector<1xf32>
      %753 = vector.multi_reduction <maximumf>, %752, %cst_206 [1, 2] : vector<1x1x128xf32> to vector<1xf32>
      %754 = vector.shape_cast %753 : vector<1xf32> to vector<1x1x1xf32>
      %755 = vector.extract %754[0, 0, 0] : f32 from vector<1x1x1xf32>
      %756 = vector.broadcast %755 : f32 to vector<1x1xf32>
      %757 = vector.broadcast %756 : vector<1x1xf32> to vector<1x128xf32>
      %758 = arith.cmpf oeq, %751, %757 : vector<1x128xf32>
      %cst_207 = arith.constant 1.280000e+02 : f32
      %759 = vector.broadcast %cst_207 : f32 to vector<1x128xf32>
      %760 = arith.select %758, %9, %759 : vector<1x128xi1>, vector<1x128xf32>
      %761 = vector.shape_cast %760 : vector<1x128xf32> to vector<1x1x128xf32>
      %cst_208 = arith.constant dense<0x7F800000> : vector<1xf32>
      %762 = vector.multi_reduction <minimumf>, %761, %cst_208 [1, 2] : vector<1x1x128xf32> to vector<1xf32>
      %763 = vector.shape_cast %762 : vector<1xf32> to vector<1x1x1xf32>
      %764 = vector.extract %763[0, 0, 0] : f32 from vector<1x1x1xf32>
      %765 = vector.broadcast %764 : f32 to vector<1x1xf32>
      %766 = vector.broadcast %765 : vector<1x1xf32> to vector<1x128xf32>
      %767 = arith.cmpf oeq, %9, %766 : vector<1x128xf32>
      %cst_209 = arith.constant 0.000000e+00 : f32
      %768 = vector.broadcast %cst_209 : f32 to vector<1x1xf32>
      %769 = arith.cmpf ogt, %756, %768 : vector<1x1xf32>
      %770 = vector.broadcast %769 : vector<1x1xi1> to vector<1x128xi1>
      %771 = arith.andi %767, %770 : vector<1x128xi1>
      %true_210 = arith.constant true
      %772 = vector.broadcast %true_210 : i1 to vector<1x128xi1>
      %773 = arith.andi %771, %772 : vector<1x128xi1>
      %cst_211 = arith.constant 1.000000e+00 : f32
      %774 = vector.broadcast %cst_211 : f32 to vector<1x128xf32>
      %775 = arith.select %773, %774, %749 : vector<1x128xi1>, vector<1x128xf32>
      %776 = arith.mulf %567, %775 : vector<1x128xf32>
      %777 = vector.shape_cast %776 : vector<1x128xf32> to vector<1x128xf32>
      %778 = vector.broadcast %777 : vector<1x128xf32> to vector<8x128xf32>
      %779 = arith.mulf %7, %778 : vector<8x128xf32>
      %cst_212 = arith.constant dense<0.000000e+00> : vector<8xf32>
      %780 = vector.multi_reduction <add>, %779, %cst_212 [1] : vector<8x128xf32> to vector<8xf32>
      %781 = vector.shape_cast %780 : vector<8xf32> to vector<8x1xf32>
      %cst_213 = arith.constant 1.500000e+00 : f32
      %782 = vector.broadcast %cst_213 : f32 to vector<8x1xf32>
      %783 = arith.mulf %782, %781 : vector<8x1xf32>
      %784 = vector.shape_cast %567 : vector<1x128xf32> to vector<1x128xf32>
      %785 = vector.broadcast %784 : vector<1x128xf32> to vector<8x128xf32>
      %786 = vector.shape_cast %775 : vector<1x128xf32> to vector<1x128xf32>
      %787 = vector.broadcast %786 : vector<1x128xf32> to vector<8x128xf32>
      %788 = vector.shape_cast %550 : vector<1x128xf32> to vector<1x128xf32>
      %789 = vector.broadcast %788 : vector<1x128xf32> to vector<8x128xf32>
      %c0_i32_214 = arith.constant 0 : i32
      %790 = vector.broadcast %c0_i32_214 : i32 to vector<8x128xi32>
      %791 = arith.cmpi eq, %14, %790 : vector<8x128xi32>
      %c1_i32_215 = arith.constant 1 : i32
      %792 = vector.broadcast %c1_i32_215 : i32 to vector<8x128xi32>
      %793 = arith.cmpi eq, %14, %792 : vector<8x128xi32>
      %c2_i32_216 = arith.constant 2 : i32
      %794 = vector.broadcast %c2_i32_216 : i32 to vector<8x128xi32>
      %795 = arith.cmpi eq, %14, %794 : vector<8x128xi32>
      %cst_217 = arith.constant 0.000000e+00 : f32
      %796 = vector.broadcast %cst_217 : f32 to vector<8x128xf32>
      %797 = arith.select %795, %789, %796 : vector<8x128xi1>, vector<8x128xf32>
      %798 = arith.select %793, %787, %797 : vector<8x128xi1>, vector<8x128xf32>
      %799 = arith.select %791, %785, %798 : vector<8x128xi1>, vector<8x128xf32>
      %c0_218 = arith.constant 0 : index
      %c0_219 = arith.constant 0 : index
      %800 = vector.load %arg7[%c0_218, %c0_219] : memref<8x128xf32, #tpu.memory_space<vmem>>, vector<8x128xf32>
      tpu.vector_store %arg7[%c0_218, %c0_219], %799 {strides = array<i32>} : memref<8x128xf32, #tpu.memory_space<vmem>>, vector<8x128xf32>,
      %801 = vector.shape_cast %783 : vector<8x1xf32> to vector<8x1xf32>
      %802 = vector.broadcast %801 : vector<8x1xf32> to vector<8x128xf32>
      %c0_220 = arith.constant 0 : index
      %c0_221 = arith.constant 0 : index
      %803 = vector.load %arg8[%c0_220, %c0_221] : memref<8x128xf32, #tpu.memory_space<vmem>>, vector<8x128xf32>
      tpu.vector_store %arg8[%c0_220, %c0_221], %802 {strides = array<i32>} : memref<8x128xf32, #tpu.memory_space<vmem>>, vector<8x128xf32>,
      %c0_222 = arith.constant 0 : index
      %c0_223 = arith.constant 0 : index
      %804 = vector.load %arg9[%c0_222, %c0_223] : memref<8x128xf32, #tpu.memory_space<vmem>>, vector<8x128xf32>
      tpu.vector_store %arg9[%c0_222, %c0_223], %557 {strides = array<i32>} : memref<8x128xf32, #tpu.memory_space<vmem>>, vector<8x128xf32>,
    } else {
    }
    return
  }
  func.func @transform_0(%arg0: i32, %arg1: memref<2xi32, #tpu.memory_space<smem>>) -> (i32, i32) {
    %c0_i32 = arith.constant 0 : i32
    %c0_i32_0 = arith.constant 0 : i32
    %c0_i32_1 = arith.constant 0 : i32
    return %c0_i32, %c0_i32_0 : i32, i32
  }
  func.func @transform_1(%arg0: i32, %arg1: memref<2xi32, #tpu.memory_space<smem>>) -> (i32, i32) {
    %c0_i32 = arith.constant 0 : i32
    %c0_i32_0 = arith.constant 0 : i32
    %c0_i32_1 = arith.constant 0 : i32
    return %c0_i32, %c0_i32_0 : i32, i32
  }
  func.func @transform_2(%arg0: i32, %arg1: memref<2xi32, #tpu.memory_space<smem>>) -> (i32, i32) {
    %c0_i32 = arith.constant 0 : i32
    %c0_i32_0 = arith.constant 0 : i32
    %c0_i32_1 = arith.constant 0 : i32
    return %c0_i32, %c0_i32_0 : i32, i32
  }
  func.func @transform_3(%arg0: i32, %arg1: memref<2xi32, #tpu.memory_space<smem>>) -> (i32, i32) {
    %c0_i32 = arith.constant 0 : i32
    %c0_i32_0 = arith.constant 0 : i32
    %c0_i32_1 = arith.constant 0 : i32
    return %c0_i32, %c0_i32_0 : i32, i32
  }
  func.func @transform_4(%arg0: i32, %arg1: memref<2xi32, #tpu.memory_space<smem>>) -> (i32, i32) {
    %c0_i32 = arith.constant 0 : i32
    %c0_i32_0 = arith.constant 0 : i32
    %c0_i32_1 = arith.constant 0 : i32
    return %c0_i32, %c0_i32_0 : i32, i32
  }
  func.func @transform_5(%arg0: i32, %arg1: memref<2xi32, #tpu.memory_space<smem>>) -> (i32, i32) {
    %c0_i32 = arith.constant 0 : i32
    %c0_i32_0 = arith.constant 0 : i32
    %c0_i32_1 = arith.constant 0 : i32
    return %c0_i32, %c0_i32_0 : i32, i32
  }
  func.func @transform_6(%arg0: i32, %arg1: memref<2xi32, #tpu.memory_space<smem>>) -> (i32, i32) {
    %c0_i32 = arith.constant 0 : i32
    %c0_i32_0 = arith.constant 0 : i32
    %c0_i32_1 = arith.constant 0 : i32
    return %c0_i32, %c0_i32_0 : i32, i32
  }
  func.func @transform_7(%arg0: i32, %arg1: memref<2xi32, #tpu.memory_space<smem>>) -> (i32, i32) {
    %c0_i32 = arith.constant 0 : i32
    %c0_i32_0 = arith.constant 0 : i32
    %c0_i32_1 = arith.constant 0 : i32
    return %c0_i32, %c0_i32_0 : i32, i32
  }
}

</mosaic_0001>

<llo_original>
// kernel: _forward_step.1
$region0: #{_forward_step.1}
  #allocation0 [shape = 'u32[]', space=smem, size = 0x4, offset = 0x4, fixed_abs, tag = 'smem constant byte address 0x4 - core index']
  #allocation1 [shape = 'u32[144,128]{1,0:T(1,128)}', space=vmem, size = 0x12000, scoped, tag = 'internal scratch']
  #allocation2 [shape = 's32[1]{0}', space=sflag, size = 0x4, scoped, tag = 'scoped memory for _forward_step.1']
  #allocation3 [shape = 'u8[512]{0}', space=smem, size = 0x200, scoped, tag = 'prefetched SMEM operand 0']
  %s0 = inlined_call_operand.vmem [shape: s32[2], index: 0, kind: input, shape index: {}]
  %s1 = inlined_call_operand.vmem [shape: f32[8,1], index: 1, kind: input, shape index: {}]
  %s2 = inlined_call_operand.vmem [shape: f32[8,128], index: 2, kind: input, shape index: {}]
  %s3 = inlined_call_operand.vmem [shape: f32[8,1], index: 3, kind: input, shape index: {}]
  %s4 = inlined_call_operand.vmem [shape: f32[1,128], index: 4, kind: input, shape index: {}]
  %s5 = inlined_call_operand.vmem [shape: f32[8,128], index: 5, kind: input, shape index: {}]
  %s6 = inlined_call_operand.vmem [shape: f32[8,128], index: 6, kind: output, shape index: {0}]
  %s7 = inlined_call_operand.vmem [shape: f32[8,128], index: 7, kind: output, shape index: {1}]
  %s8 = inlined_call_operand.hbm [shape: f32[8,128], index: 8, kind: output, shape index: {2}]
  %9 = xla_tuple %s6, %s7, %s8
  %s10 = sld [smem:[#allocation0]]
  $region50: #{_forward_step.1} parent=0
    _
  %s12 = ssub.s32 1, %s10
  %s13 = scalar_select 0, %s12, %s10
  %s14 = sshll.u32 %s0, 4
  %s15 = int_to_ptr.vmem [resolvable:$true] %s14
  %17 = dma.vmem_to_smem %s15, 16, [#allocation3], [#allocation2]
  %18 = dma.done [#allocation2], 16
  %19 = sfence
  $region1: #{_forward_step.1} parent=0
    #allocation4 [shape = 'u8[4096]{0}', space=vmem, size = 0x1000, scoped, tag = 'output window, operand 2, single buffered']
    #allocation5 [shape = 's32[1]{0}', space=sflag, size = 0x4, scoped, tag = 'scoped memory for _forward_step.1']
    %20 = vsyncpa [#allocation5], 0
    // Predicated region
    $region2: #{_forward_step.1} parent=1 // pred_check
      _
    $region3: #{_forward_step.1} parent=1 // pred_check_branch
      %22 = sbr.rel (0) target = $region5
    $region4: #{_forward_step.1} parent=1 // pred_region
      _
    $region5: #{_forward_step.1} parent=1 // pred_fallthru
      _
    // Predicated region
    $region6: #{_forward_step.1} parent=1 // pred_check
      _
    $region7: #{_forward_step.1} parent=1 // pred_check_branch
      %24 = sbr.rel (0) target = $region9
    $region8: #{_forward_step.1} parent=1 // pred_region
      _
    $region9: #{_forward_step.1} parent=1 // pred_fallthru
      _
    // Predicated region
    $region10: #{_forward_step.1} parent=1 // pred_check
      _
    $region11: #{_forward_step.1} parent=1 // pred_check_branch
      %26 = sbr.rel (0) target = $region13
    $region12: #{_forward_step.1} parent=1 // pred_region
      _
    $region13: #{_forward_step.1} parent=1 // pred_fallthru
      _
    // Predicated region
    $region14: #{_forward_step.1} parent=1 // pred_check
      _
    $region15: #{_forward_step.1} parent=1 // pred_check_branch
      %28 = sbr.rel (0) target = $region17
    $region16: #{_forward_step.1} parent=1 // pred_region
      _
    $region17: #{_forward_step.1} parent=1 // pred_fallthru
      _
    // Predicated region
    $region18: #{_forward_step.1} parent=1 // pred_check
      _
    $region19: #{_forward_step.1} parent=1 // pred_check_branch
      %30 = sbr.rel (0) target = $region21
    $region20: #{_forward_step.1} parent=1 // pred_region
      _
    $region21: #{_forward_step.1} parent=1 // pred_fallthru
      _
    %s31 = sld [smem:[#allocation3]]
    %s32 = sld [smem:[#allocation3 + $0x1]]
    %s33 = scvt.s32.f32 %s32
    %v34 = vld [vmem:[%s1] sm:$0xff]
    %v35 = vld [vmem:[%s2] sm:$0xff]
    %v36 = vld [vmem:[%s3] sm:$0xff]
    %v37 = vld [vmem:[%s4] sm:$0x1]
    %v38 = vld [vmem:[%s5] sm:$0xff]
    %v39 = vlaneseq
    %v40 = vand.u32 %v39, 127
    %v41 = vcvt.s32.f32 %v40
    %v42 = vlaneseq
    %v43 = vshrl.u32 %v42, 7
    %v44 = vcvt.s32.f32 %v43
    %vm45 = vcmp.lt.f32.partialorder %v44, 4.0
    %47 = vset.pattern.permute.xlu0 0
    %48 = vperm.xlu0 %47, %v34
    %v49 = vpop.permute.xlu0 %48
    %v51 = vsub.f32 %v49, %v35
    %v52 = vand.u32 2147483647, %v51
    %54 = vset.pattern.permute.xlu0 0
    %55 = vperm.xlu0 %54, %v36
    %v56 = vpop.permute.xlu0 %55
    %v58 = vmul.f32 %v56, %v52
    %v59 = vrot.slane %v58, 4
    %v60 = vadd.f32 %v58, %v59
    %v61 = vrot.slane %v60, 2
    %v62 = vadd.f32 %v60, %v61
    %v63 = vrot.slane %v62, 1
    %v64 = vadd.f32 %v62, %v63
    %v65 = vmul.f32 %v64, -1.0
    %v66 = vmul.f32 %v65, 1.442695
    %v67 = vpow.pop %v66
    %v68 = vmul.f32 %v67, %v37
    %vm69 = vcmask 1040384
    %v70 = vsel %vm69, %v68, -inf
    %71 = vmax.xlane.f32.xlu0 %v70
    %v72 = vpop.xlane.xlu0 %71
    %v73 = vrot.slane %v72, 4
    %v74 = vmax.f32 %v72, %v73
    %v75 = vrot.slane %v74, 2
    %v76 = vmax.f32 %v74, %v75
    %v77 = vrot.slane %v76, 1
    %v78 = vmax.f32 %v76, %v77
    %s79 = vtos %v78
    %v80 = vstv %s79
    %vm81 = vcmp.eq.f32.partialorder %v68, %v80
    %v82 = vsel %vm81, %v41, 128.0
    %v83 = vsel %vm69, %v82, inf
    %84 = vmin.xlane.f32.xlu0 %v83
    %v85 = vpop.xlane.xlu0 %84
    %v86 = vrot.slane %v85, 4
    %v87 = vmin.f32 %v85, %v86
    %v88 = vrot.slane %v87, 2
    %v89 = vmin.f32 %v87, %v88
    %v90 = vrot.slane %v89, 1
    %v91 = vmin.f32 %v89, %v90
    %s92 = vtos %v91
    %v93 = vstv %s92
    %vm94 = vcmp.eq.f32.partialorder %v41, %v93
    %vm95 = vcmp.gt.f32.partialorder %v80, 0.0
    %v96 = vsel %vm95, 1, 0
    %vm97 = vcmp.eq.s32.totalorder %v96, 1
    %vm98 = vmand %vm94, %vm97
    %v99 = vsel %vm98, 1.0, 0.0
    %v100 = vsel %vm98, 0.0, %v68
    %v101 = vsel %vm69, %v100, -inf
    %102 = vmax.xlane.f32.xlu0 %v101
    %v103 = vpop.xlane.xlu0 %102
    %v104 = vrot.slane %v103, 4
    %v105 = vmax.f32 %v103, %v104
    %v106 = vrot.slane %v105, 2
    %v107 = vmax.f32 %v105, %v106
    %v108 = vrot.slane %v107, 1
    %v109 = vmax.f32 %v107, %v108
    %s110 = vtos %v109
    %v111 = vstv %s110
    %vm112 = vcmp.eq.f32.partialorder %v100, %v111
    %v113 = vsel %vm112, %v41, 128.0
    %v114 = vsel %vm69, %v113, inf
    %115 = vmin.xlane.f32.xlu0 %v114
    %v116 = vpop.xlane.xlu0 %115
    %v117 = vrot.slane %v116, 4
    %v118 = vmin.f32 %v116, %v117
    %v119 = vrot.slane %v118, 2
    %v120 = vmin.f32 %v118, %v119
    %v121 = vrot.slane %v120, 1
    %v122 = vmin.f32 %v120, %v121
    %s123 = vtos %v122
    %v124 = vstv %s123
    %vm125 = vcmp.eq.f32.partialorder %v41, %v124
    %vm126 = vcmp.gt.f32.partialorder %v111, 0.0
    %v127 = vsel %vm126, 1, 0
    %vm128 = vcmp.eq.s32.totalorder %v127, 1
    %vm129 = vmand %vm125, %vm128
    %v130 = vsel %vm129, 1.0, %v99
    %v131 = vsel %vm129, 0.0, %v100
    %v132 = vsel %vm69, %v131, -inf
    %133 = vmax.xlane.f32.xlu0 %v132
    %v134 = vpop.xlane.xlu0 %133
    %v135 = vrot.slane %v134, 4
    %v136 = vmax.f32 %v134, %v135
    %v137 = vrot.slane %v136, 2
    %v138 = vmax.f32 %v136, %v137
    %v139 = vrot.slane %v138, 1
    %v140 = vmax.f32 %v138, %v139
    %s141 = vtos %v140
    %v142 = vstv %s141
    %vm143 = vcmp.eq.f32.partialorder %v131, %v142
    %v144 = vsel %vm143, %v41, 128.0
    %v145 = vsel %vm69, %v144, inf
    %146 = vmin.xlane.f32.xlu0 %v145
    %v147 = vpop.xlane.xlu0 %146
    %v148 = vrot.slane %v147, 4
    %v149 = vmin.f32 %v147, %v148
    %v150 = vrot.slane %v149, 2
    %v151 = vmin.f32 %v149, %v150
    %v152 = vrot.slane %v151, 1
    %v153 = vmin.f32 %v151, %v152
    %s154 = vtos %v153
    %v155 = vstv %s154
    %vm156 = vcmp.eq.f32.partialorder %v41, %v155
    %vm157 = vcmp.gt.f32.partialorder %v142, 0.0
    %v158 = vsel %vm157, 1, 0
    %vm159 = vcmp.eq.s32.totalorder %v158, 1
    %vm160 = vmand %vm156, %vm159
    %v161 = vsel %vm160, 1.0, %v130
    %v162 = vsel %vm160, 0.0, %v131
    %v163 = vsel %vm69, %v162, -inf
    %164 = vmax.xlane.f32.xlu0 %v163
    %v165 = vpop.xlane.xlu0 %164
    %v166 = vrot.slane %v165, 4
    %v167 = vmax.f32 %v165, %v166
    %v168 = vrot.slane %v167, 2
    %v169 = vmax.f32 %v167, %v168
    %v170 = vrot.slane %v169, 1
    %v171 = vmax.f32 %v169, %v170
    %s172 = vtos %v171
    %v173 = vstv %s172
    %vm174 = vcmp.eq.f32.partialorder %v162, %v173
    %v175 = vsel %vm174, %v41, 128.0
    %v176 = vsel %vm69, %v175, inf
    %177 = vmin.xlane.f32.xlu0 %v176
    %v178 = vpop.xlane.xlu0 %177
    %v179 = vrot.slane %v178, 4
    %v180 = vmin.f32 %v178, %v179
    %v181 = vrot.slane %v180, 2
    %v182 = vmin.f32 %v180, %v181
    %v183 = vrot.slane %v182, 1
    %v184 = vmin.f32 %v182, %v183
    %s185 = vtos %v184
    %v186 = vstv %s185
    %vm187 = vcmp.eq.f32.partialorder %v41, %v186
    %vm188 = vcmp.gt.f32.partialorder %v173, 0.0
    %v189 = vsel %vm188, 1, 0
    %vm190 = vcmp.eq.s32.totalorder %v189, 1
    %vm191 = vmand %vm187, %vm190
    %v192 = vsel %vm191, 1.0, %v161
    %v193 = vsel %vm191, 0.0, %v162
    %v194 = vsel %vm69, %v193, -inf
    %195 = vmax.xlane.f32.xlu0 %v194
    %v196 = vpop.xlane.xlu0 %195
    %v197 = vrot.slane %v196, 4
    %v198 = vmax.f32 %v196, %v197
    %v199 = vrot.slane %v198, 2
    %v200 = vmax.f32 %v198, %v199
    %v201 = vrot.slane %v200, 1
    %v202 = vmax.f32 %v200, %v201
    %s203 = vtos %v202
    %v204 = vstv %s203
    %vm205 = vcmp.eq.f32.partialorder %v193, %v204
    %v206 = vsel %vm205, %v41, 128.0
    %v207 = vsel %vm69, %v206, inf
    %208 = vmin.xlane.f32.xlu0 %v207
    %v209 = vpop.xlane.xlu0 %208
    %v210 = vrot.slane %v209, 4
    %v211 = vmin.f32 %v209, %v210
    %v212 = vrot.slane %v211, 2
    %v213 = vmin.f32 %v211, %v212
    %v214 = vrot.slane %v213, 1
    %v215 = vmin.f32 %v213, %v214
    %s216 = vtos %v215
    %v217 = vstv %s216
    %vm218 = vcmp.eq.f32.partialorder %v41, %v217
    %vm219 = vcmp.gt.f32.partialorder %v204, 0.0
    %v220 = vsel %vm219, 1, 0
    %vm221 = vcmp.eq.s32.totalorder %v220, 1
    %vm222 = vmand %vm218, %vm221
    %v223 = vsel %vm222, 1.0, %v192
    %v224 = vsel %vm222, 0.0, %v193
    %v225 = vsel %vm69, %v224, -inf
    %226 = vmax.xlane.f32.xlu0 %v225
    %v227 = vpop.xlane.xlu0 %226
    %v228 = vrot.slane %v227, 4
    %v229 = vmax.f32 %v227, %v228
    %v230 = vrot.slane %v229, 2
    %v231 = vmax.f32 %v229, %v230
    %v232 = vrot.slane %v231, 1
    %v233 = vmax.f32 %v231, %v232
    %s234 = vtos %v233
    %v235 = vstv %s234
    %vm236 = vcmp.eq.f32.partialorder %v224, %v235
    %v237 = vsel %vm236, %v41, 128.0
    %v238 = vsel %vm69, %v237, inf
    %239 = vmin.xlane.f32.xlu0 %v238
    %v240 = vpop.xlane.xlu0 %239
    %v241 = vrot.slane %v240, 4
    %v242 = vmin.f32 %v240, %v241
    %v243 = vrot.slane %v242, 2
    %v244 = vmin.f32 %v242, %v243
    %v245 = vrot.slane %v244, 1
    %v246 = vmin.f32 %v244, %v245
    %s247 = vtos %v246
    %v248 = vstv %s247
    %vm249 = vcmp.eq.f32.partialorder %v41, %v248
    %vm250 = vcmp.gt.f32.partialorder %v235, 0.0
    %v251 = vsel %vm250, 1, 0
    %vm252 = vcmp.eq.s32.totalorder %v251, 1
    %vm253 = vmand %vm249, %vm252
    %v254 = vsel %vm253, 1.0, %v223
    %v255 = vsel %vm253, 0.0, %v224
    %v256 = vsel %vm69, %v255, -inf
    %257 = vmax.xlane.f32.xlu0 %v256
    %v258 = vpop.xlane.xlu0 %257
    %v259 = vrot.slane %v258, 4
    %v260 = vmax.f32 %v258, %v259
    %v261 = vrot.slane %v260, 2
    %v262 = vmax.f32 %v260, %v261
    %v263 = vrot.slane %v262, 1
    %v264 = vmax.f32 %v262, %v263
    %s265 = vtos %v264
    %v266 = vstv %s265
    %vm267 = vcmp.eq.f32.partialorder %v255, %v266
    %v268 = vsel %vm267, %v41, 128.0
    %v269 = vsel %vm69, %v268, inf
    %270 = vmin.xlane.f32.xlu0 %v269
    %v271 = vpop.xlane.xlu0 %270
    %v272 = vrot.slane %v271, 4
    %v273 = vmin.f32 %v271, %v272
    %v274 = vrot.slane %v273, 2
    %v275 = vmin.f32 %v273, %v274
    %v276 = vrot.slane %v275, 1
    %v277 = vmin.f32 %v275, %v276
    %s278 = vtos %v277
    %v279 = vstv %s278
    %vm280 = vcmp.eq.f32.partialorder %v41, %v279
    %vm281 = vcmp.gt.f32.partialorder %v266, 0.0
    %v282 = vsel %vm281, 1, 0
    %vm283 = vcmp.eq.s32.totalorder %v282, 1
    %vm284 = vmand %vm280, %vm283
    %v285 = vsel %vm284, 1.0, %v254
    %v286 = vsel %vm284, 0.0, %v255
    %v287 = vsel %vm69, %v286, -inf
    %288 = vmax.xlane.f32.xlu0 %v287
    %v289 = vpop.xlane.xlu0 %288
    %v290 = vrot.slane %v289, 4
    %v291 = vmax.f32 %v289, %v290
    %v292 = vrot.slane %v291, 2
    %v293 = vmax.f32 %v291, %v292
    %v294 = vrot.slane %v293, 1
    %v295 = vmax.f32 %v293, %v294
    %s296 = vtos %v295
    %v297 = vstv %s296
    %vm298 = vcmp.eq.f32.partialorder %v286, %v297
    %v299 = vsel %vm298, %v41, 128.0
    %v300 = vsel %vm69, %v299, inf
    %301 = vmin.xlane.f32.xlu0 %v300
    %v302 = vpop.xlane.xlu0 %301
    %v303 = vrot.slane %v302, 4
    %v304 = vmin.f32 %v302, %v303
    %v305 = vrot.slane %v304, 2
    %v306 = vmin.f32 %v304, %v305
    %v307 = vrot.slane %v306, 1
    %v308 = vmin.f32 %v306, %v307
    %s309 = vtos %v308
    %v310 = vstv %s309
    %vm311 = vcmp.eq.f32.partialorder %v41, %v310
    %vm312 = vcmp.gt.f32.partialorder %v297, 0.0
    %v313 = vsel %vm312, 1, 0
    %vm314 = vcmp.eq.s32.totalorder %v313, 1
    %vm315 = vmand %vm311, %vm314
    %v316 = vsel %vm315, 1.0, %v285
    %v317 = vmul.f32 %v67, %v316
    %v318 = vmul.f32 %v38, %v317
    %319 = vadd.xlane.f32.xlu0 %v318
    %v320 = vpop.xlane.xlu0 %319
    %v321 = vmul.f32 %v320, 1.5
    %v322 = vsel %vm45, %v321, -inf
    %v323 = vrot.slane %v322, 4
    %v324 = vmax.f32 %v322, %v323
    %v325 = vrot.slane %v324, 2
    %v326 = vmax.f32 %v324, %v325
    %v327 = vrot.slane %v326, 1
    %v328 = vmax.f32 %v326, %v327
    %s329 = vtos %v328
    %v330 = vstv %s329
    %vm331 = vcmp.eq.f32.partialorder %v322, %v330
    %v332 = vsel %vm331, %v44, 8.0
    %v333 = vrot.slane %v332, 4
    %v334 = vmin.f32 %v332, %v333
    %v335 = vrot.slane %v334, 2
    %v336 = vmin.f32 %v334, %v335
    %v337 = vrot.slane %v336, 1
    %v338 = vmin.f32 %v336, %v337
    %s339 = vtos %v338
    %p340 = scmp.ne.f32.partialorder %s339, %s33
    %v341 = vsel %vm45, %v321, 0.0
    %v342 = vand.u32 2147483647, %v341
    %v343 = vrot.slane %v342, 4
    %v344 = vmax.f32 %v342, %v343
    %v345 = vrot.slane %v344, 2
    %v346 = vmax.f32 %v344, %v345
    %v347 = vrot.slane %v346, 1
    %v348 = vmax.f32 %v346, %v347
    %s349 = vtos %v348
    %p350 = scmp.eq.f32.partialorder %s349, 0.0
    %v351 = vsel %vm69, %v37, 0.0
    %352 = vadd.xlane.f32.xlu0 %v351
    %v353 = vpop.xlane.xlu0 %352
    %v354 = vrot.slane %v353, 4
    %v355 = vadd.f32 %v353, %v354
    %v356 = vrot.slane %v355, 2
    %v357 = vadd.f32 %v355, %v356
    %v358 = vrot.slane %v357, 1
    %v359 = vadd.f32 %v357, %v358
    %s360 = vtos %v359
    %p361 = scmp.lt.f32.partialorder %s360, 128.0
    %p362 = por %p340, %p350
    %p363 = pnand %p362, %p361
    %p364 = pneg %p363
    %v366 = vlaneseq
    %v367 = vshrl.u32 %v366, 7
    %v368 = vsub.s32 0, %v367
    %v369 = vrot.slane %v37, %v368
    %vm371 = vcmp.eq.s32.totalorder %v43, 0
    %vm372 = vcmp.eq.s32.totalorder %v43, 1
    %vm373 = vcmp.eq.s32.totalorder %v43, 2
    %v374 = vsel %vm373, %v369, 0.0
    %v375 = vsel %vm372, %v316, %v374
    %v376 = vsel %vm371, %v67, %v375
    %377 = vst [vmem:[%s6] sm:$0xff] %v376
    %378 = vst [vmem:[%s7] sm:$0xff] %v321
    %379 = vst [vmem:[#allocation4] sm:$0xff] %v35
    // Predicated region
    $region22: #{_forward_step.1} parent=1 // pred_check
      _
    $region23: #{_forward_step.1} parent=1 // pred_check_branch
      %381 = sbr.rel (%p363) target = $region25
    $region24: #{_forward_step.1} parent=1 // pred_region
      %v382 = vsel %vm45, 1, 0
      %vm383 = vcmp.eq.s32.totalorder %v382, 1
      %v384 = vsel %vm383, %v38, -inf
      %v385 = vrot.slane %v384, 4
      %v386 = vmax.f32 %v384, %v385
      %v387 = vrot.slane %v386, 2
      %v388 = vmax.f32 %v386, %v387
      %v389 = vrot.slane %v388, 1
      %v390 = vmax.f32 %v388, %v389
      %vm391 = vcmp.eq.f32.partialorder %v384, %v390
      %v392 = vsel %vm391, %v44, 8.0
      %v393 = vrot.slane %v392, 4
      %v394 = vmin.f32 %v392, %v393
      %v395 = vrot.slane %v394, 2
      %v396 = vmin.f32 %v394, %v395
      %v397 = vrot.slane %v396, 1
      %v398 = vmin.f32 %v396, %v397
      %v399 = vstv %s33
      %vm400 = vcmp.ne.f32.partialorder %v398, %v399
      %v401 = vsel %vm400, 1.0, 0.0
      %v402 = vmul.f32 %v316, %v401
      %v403 = vsel %vm69, %v402, 0.0
      %404 = vadd.xlane.f32.xlu0 %v403
      %v405 = vpop.xlane.xlu0 %404
      %v406 = vrot.slane %v405, 4
      %v407 = vadd.f32 %v405, %v406
      %v408 = vrot.slane %v407, 2
      %v409 = vadd.f32 %v407, %v408
      %v410 = vrot.slane %v409, 1
      %v411 = vadd.f32 %v409, %v410
      %s412 = vtos %v411
      %v413 = vstv %s412
      %p414 = scmp.gt.s32.totalorder %s31, 0
      %s415 = scalar_select %p414, 1, 0
      %v416 = vstv %s415
      %vm417 = vcmp.eq.s32.totalorder %v416, 1
      %v418 = vsel %vm417, 8.0, %v413
      %v419 = vsub.f32 1.0, %v37
      %v420 = vmul.f32 %v67, %v419
      %v421 = vsel %vm417, %v67, %v420
      %v422 = vsel %vm69, %v421, -inf
      %423 = vmax.xlane.f32.xlu0 %v422
      %v424 = vpop.xlane.xlu0 %423
      %v425 = vrot.slane %v424, 4
      %v426 = vmax.f32 %v424, %v425
      %v427 = vrot.slane %v426, 2
      %v428 = vmax.f32 %v426, %v427
      %v429 = vrot.slane %v428, 1
      %v430 = vmax.f32 %v428, %v429
      %s431 = vtos %v430
      %v432 = vstv %s431
      %vm433 = vcmp.eq.f32.partialorder %v421, %v432
      %v434 = vsel %vm433, %v41, 128.0
      %v435 = vsel %vm69, %v434, inf
      %436 = vmin.xlane.f32.xlu0 %v435
      %v437 = vpop.xlane.xlu0 %436
      %v438 = vrot.slane %v437, 4
      %v439 = vmin.f32 %v437, %v438
      %v440 = vrot.slane %v439, 2
      %v441 = vmin.f32 %v439, %v440
      %v442 = vrot.slane %v441, 1
      %v443 = vmin.f32 %v441, %v442
      %s444 = vtos %v443
      %v445 = vstv %s444
      %vm446 = vcmp.eq.f32.partialorder %v41, %v445
      %vm447 = vcmp.gt.f32.partialorder %v432, 0.0
      %v448 = vsel %vm447, 1, 0
      %vm449 = vcmp.eq.s32.totalorder %v448, 1
      %vm450 = vmand %vm446, %vm449
      %vm451 = vcmp.gt.f32.partialorder %v418, 0.0
      %v452 = vsel %vm451, 1, 0
      %vm453 = vcmp.eq.s32.totalorder %v452, 1
      %vm454 = vmand %vm450, %vm453
      %v455 = vsel %vm454, 1.0, 0.0
      %v456 = vsel %vm454, 0.0, %v421
      %v457 = vsel %vm69, %v456, -inf
      %458 = vmax.xlane.f32.xlu0 %v457
      %v459 = vpop.xlane.xlu0 %458
      %v460 = vrot.slane %v459, 4
      %v461 = vmax.f32 %v459, %v460
      %v462 = vrot.slane %v461, 2
      %v463 = vmax.f32 %v461, %v462
      %v464 = vrot.slane %v463, 1
      %v465 = vmax.f32 %v463, %v464
      %s466 = vtos %v465
      %v467 = vstv %s466
      %vm468 = vcmp.eq.f32.partialorder %v456, %v467
      %v469 = vsel %vm468, %v41, 128.0
      %v470 = vsel %vm69, %v469, inf
      %471 = vmin.xlane.f32.xlu0 %v470
      %v472 = vpop.xlane.xlu0 %471
      %v473 = vrot.slane %v472, 4
      %v474 = vmin.f32 %v472, %v473
      %v475 = vrot.slane %v474, 2
      %v476 = vmin.f32 %v474, %v475
      %v477 = vrot.slane %v476, 1
      %v478 = vmin.f32 %v476, %v477
      %s479 = vtos %v478
      %v480 = vstv %s479
      %vm481 = vcmp.eq.f32.partialorder %v41, %v480
      %vm482 = vcmp.gt.f32.partialorder %v467, 0.0
      %v483 = vsel %vm482, 1, 0
      %vm484 = vcmp.eq.s32.totalorder %v483, 1
      %vm485 = vmand %vm481, %vm484
      %vm486 = vcmp.gt.f32.partialorder %v418, 1.0
      %v487 = vsel %vm486, 1, 0
      %vm488 = vcmp.eq.s32.totalorder %v487, 1
      %vm489 = vmand %vm485, %vm488
      %v490 = vsel %vm489, 1.0, %v455
      %v491 = vsel %vm489, 0.0, %v456
      %v492 = vsel %vm69, %v491, -inf
      %493 = vmax.xlane.f32.xlu0 %v492
      %v494 = vpop.xlane.xlu0 %493
      %v495 = vrot.slane %v494, 4
      %v496 = vmax.f32 %v494, %v495
      %v497 = vrot.slane %v496, 2
      %v498 = vmax.f32 %v496, %v497
      %v499 = vrot.slane %v498, 1
      %v500 = vmax.f32 %v498, %v499
      %s501 = vtos %v500
      %v502 = vstv %s501
      %vm503 = vcmp.eq.f32.partialorder %v491, %v502
      %v504 = vsel %vm503, %v41, 128.0
      %v505 = vsel %vm69, %v504, inf
      %506 = vmin.xlane.f32.xlu0 %v505
      %v507 = vpop.xlane.xlu0 %506
      %v508 = vrot.slane %v507, 4
      %v509 = vmin.f32 %v507, %v508
      %v510 = vrot.slane %v509, 2
      %v511 = vmin.f32 %v509, %v510
      %v512 = vrot.slane %v511, 1
      %v513 = vmin.f32 %v511, %v512
      %s514 = vtos %v513
      %v515 = vstv %s514
      %vm516 = vcmp.eq.f32.partialorder %v41, %v515
      %vm517 = vcmp.gt.f32.partialorder %v502, 0.0
      %v518 = vsel %vm517, 1, 0
      %vm519 = vcmp.eq.s32.totalorder %v518, 1
      %vm520 = vmand %vm516, %vm519
      %vm521 = vcmp.gt.f32.partialorder %v418, 2.0
      %v522 = vsel %vm521, 1, 0
      %vm523 = vcmp.eq.s32.totalorder %v522, 1
      %vm524 = vmand %vm520, %vm523
      %v525 = vsel %vm524, 1.0, %v490
      %v526 = vsel %vm524, 0.0, %v491
      %v527 = vsel %vm69, %v526, -inf
      %528 = vmax.xlane.f32.xlu0 %v527
      %v529 = vpop.xlane.xlu0 %528
      %v530 = vrot.slane %v529, 4
      %v531 = vmax.f32 %v529, %v530
      %v532 = vrot.slane %v531, 2
      %v533 = vmax.f32 %v531, %v532
      %v534 = vrot.slane %v533, 1
      %v535 = vmax.f32 %v533, %v534
      %s536 = vtos %v535
      %v537 = vstv %s536
      %vm538 = vcmp.eq.f32.partialorder %v526, %v537
      %v539 = vsel %vm538, %v41, 128.0
      %v540 = vsel %vm69, %v539, inf
      %541 = vmin.xlane.f32.xlu0 %v540
      %v542 = vpop.xlane.xlu0 %541
      %v543 = vrot.slane %v542, 4
      %v544 = vmin.f32 %v542, %v543
      %v545 = vrot.slane %v544, 2
      %v546 = vmin.f32 %v544, %v545
      %v547 = vrot.slane %v546, 1
      %v548 = vmin.f32 %v546, %v547
      %s549 = vtos %v548
      %v550 = vstv %s549
      %vm551 = vcmp.eq.f32.partialorder %v41, %v550
      %vm552 = vcmp.gt.f32.partialorder %v537, 0.0
      %v553 = vsel %vm552, 1, 0
      %vm554 = vcmp.eq.s32.totalorder %v553, 1
      %vm555 = vmand %vm551, %vm554
      %vm556 = vcmp.gt.f32.partialorder %v418, 3.0
      %v557 = vsel %vm556, 1, 0
      %vm558 = vcmp.eq.s32.totalorder %v557, 1
      %vm559 = vmand %vm555, %vm558
      %v560 = vsel %vm559, 1.0, %v525
      %v561 = vsel %vm559, 0.0, %v526
      %v562 = vsel %vm69, %v561, -inf
      %563 = vmax.xlane.f32.xlu0 %v562
      %v564 = vpop.xlane.xlu0 %563
      %v565 = vrot.slane %v564, 4
      %v566 = vmax.f32 %v564, %v565
      %v567 = vrot.slane %v566, 2
      %v568 = vmax.f32 %v566, %v567
      %v569 = vrot.slane %v568, 1
      %v570 = vmax.f32 %v568, %v569
      %s571 = vtos %v570
      %v572 = vstv %s571
      %vm573 = vcmp.eq.f32.partialorder %v561, %v572
      %v574 = vsel %vm573, %v41, 128.0
      %v575 = vsel %vm69, %v574, inf
      %576 = vmin.xlane.f32.xlu0 %v575
      %v577 = vpop.xlane.xlu0 %576
      %v578 = vrot.slane %v577, 4
      %v579 = vmin.f32 %v577, %v578
      %v580 = vrot.slane %v579, 2
      %v581 = vmin.f32 %v579, %v580
      %v582 = vrot.slane %v581, 1
      %v583 = vmin.f32 %v581, %v582
      %s584 = vtos %v583
      %v585 = vstv %s584
      %vm586 = vcmp.eq.f32.partialorder %v41, %v585
      %vm587 = vcmp.gt.f32.partialorder %v572, 0.0
      %v588 = vsel %vm587, 1, 0
      %vm589 = vcmp.eq.s32.totalorder %v588, 1
      %vm590 = vmand %vm586, %vm589
      %vm591 = vcmp.gt.f32.partialorder %v418, 4.0
      %v592 = vsel %vm591, 1, 0
      %vm593 = vcmp.eq.s32.totalorder %v592, 1
      %vm594 = vmand %vm590, %vm593
      %v595 = vsel %vm594, 1.0, %v560
      %v596 = vsel %vm594, 0.0, %v561
      %v597 = vsel %vm69, %v596, -inf
      %598 = vmax.xlane.f32.xlu0 %v597
      %v599 = vpop.xlane.xlu0 %598
      %v600 = vrot.slane %v599, 4
      %v601 = vmax.f32 %v599, %v600
      %v602 = vrot.slane %v601, 2
      %v603 = vmax.f32 %v601, %v602
      %v604 = vrot.slane %v603, 1
      %v605 = vmax.f32 %v603, %v604
      %s606 = vtos %v605
      %v607 = vstv %s606
      %vm608 = vcmp.eq.f32.partialorder %v596, %v607
      %v609 = vsel %vm608, %v41, 128.0
      %v610 = vsel %vm69, %v609, inf
      %611 = vmin.xlane.f32.xlu0 %v610
      %v612 = vpop.xlane.xlu0 %611
      %v613 = vrot.slane %v612, 4
      %v614 = vmin.f32 %v612, %v613
      %v615 = vrot.slane %v614, 2
      %v616 = vmin.f32 %v614, %v615
      %v617 = vrot.slane %v616, 1
      %v618 = vmin.f32 %v616, %v617
      %s619 = vtos %v618
      %v620 = vstv %s619
      %vm621 = vcmp.eq.f32.partialorder %v41, %v620
      %vm622 = vcmp.gt.f32.partialorder %v607, 0.0
      %v623 = vsel %vm622, 1, 0
      %vm624 = vcmp.eq.s32.totalorder %v623, 1
      %vm625 = vmand %vm621, %vm624
      %vm626 = vcmp.gt.f32.partialorder %v418, 5.0
      %v627 = vsel %vm626, 1, 0
      %vm628 = vcmp.eq.s32.totalorder %v627, 1
      %vm629 = vmand %vm625, %vm628
      %v630 = vsel %vm629, 1.0, %v595
      %v631 = vsel %vm629, 0.0, %v596
      %v632 = vsel %vm69, %v631, -inf
      %633 = vmax.xlane.f32.xlu0 %v632
      %v634 = vpop.xlane.xlu0 %633
      %v635 = vrot.slane %v634, 4
      %v636 = vmax.f32 %v634, %v635
      %v637 = vrot.slane %v636, 2
      %v638 = vmax.f32 %v636, %v637
      %v639 = vrot.slane %v638, 1
      %v640 = vmax.f32 %v638, %v639
      %s641 = vtos %v640
      %v642 = vstv %s641
      %vm643 = vcmp.eq.f32.partialorder %v631, %v642
      %v644 = vsel %vm643, %v41, 128.0
      %v645 = vsel %vm69, %v644, inf
      %646 = vmin.xlane.f32.xlu0 %v645
      %v647 = vpop.xlane.xlu0 %646
      %v648 = vrot.slane %v647, 4
      %v649 = vmin.f32 %v647, %v648
      %v650 = vrot.slane %v649, 2
      %v651 = vmin.f32 %v649, %v650
      %v652 = vrot.slane %v651, 1
      %v653 = vmin.f32 %v651, %v652
      %s654 = vtos %v653
      %v655 = vstv %s654
      %vm656 = vcmp.eq.f32.partialorder %v41, %v655
      %vm657 = vcmp.gt.f32.partialorder %v642, 0.0
      %v658 = vsel %vm657, 1, 0
      %vm659 = vcmp.eq.s32.totalorder %v658, 1
      %vm660 = vmand %vm656, %vm659
      %vm661 = vcmp.gt.f32.partialorder %v418, 6.0
      %v662 = vsel %vm661, 1, 0
      %vm663 = vcmp.eq.s32.totalorder %v662, 1
      %vm664 = vmand %vm660, %vm663
      %v665 = vsel %vm664, 1.0, %v630
      %v666 = vsel %vm664, 0.0, %v631
      %v667 = vsel %vm69, %v666, -inf
      %668 = vmax.xlane.f32.xlu0 %v667
      %v669 = vpop.xlane.xlu0 %668
      %v670 = vrot.slane %v669, 4
      %v671 = vmax.f32 %v669, %v670
      %v672 = vrot.slane %v671, 2
      %v673 = vmax.f32 %v671, %v672
      %v674 = vrot.slane %v673, 1
      %v675 = vmax.f32 %v673, %v674
      %s676 = vtos %v675
      %v677 = vstv %s676
      %vm678 = vcmp.eq.f32.partialorder %v666, %v677
      %v679 = vsel %vm678, %v41, 128.0
      %v680 = vsel %vm69, %v679, inf
      %681 = vmin.xlane.f32.xlu0 %v680
      %v682 = vpop.xlane.xlu0 %681
      %v683 = vrot.slane %v682, 4
      %v684 = vmin.f32 %v682, %v683
      %v685 = vrot.slane %v684, 2
      %v686 = vmin.f32 %v684, %v685
      %v687 = vrot.slane %v686, 1
      %v688 = vmin.f32 %v686, %v687
      %s689 = vtos %v688
      %v690 = vstv %s689
      %vm691 = vcmp.eq.f32.partialorder %v41, %v690
      %vm692 = vcmp.gt.f32.partialorder %v677, 0.0
      %v693 = vsel %vm692, 1, 0
      %vm694 = vcmp.eq.s32.totalorder %v693, 1
      %vm695 = vmand %vm691, %vm694
      %vm696 = vcmp.gt.f32.partialorder %v418, 7.0
      %v697 = vsel %vm696, 1, 0
      %vm698 = vcmp.eq.s32.totalorder %v697, 1
      %vm699 = vmand %vm695, %vm698
      %v700 = vsel %vm699, 1.0, %v665
      %v701 = vmax.f32 %v37, %v700
      %vm702 = vcmp.gt.f32.partialorder %v700, 0.0
      %v703 = vsel %vm702, 1, 0
      %vm704 = vcmp.eq.s32.totalorder %v703, 1
      %v705 = vsel %vm704, %v49, %v35
      %v706 = vsub.f32 %v49, %v705
      %v707 = vand.u32 2147483647, %v706
      %v708 = vmul.f32 %v56, %v707
      %v709 = vrot.slane %v708, 4
      %v710 = vadd.f32 %v708, %v709
      %v711 = vrot.slane %v710, 2
      %v712 = vadd.f32 %v710, %v711
      %v713 = vrot.slane %v712, 1
      %v714 = vadd.f32 %v712, %v713
      %v715 = vmul.f32 %v714, -1.0
      %v716 = vmul.f32 %v715, 1.442695
      %v717 = vpow.pop %v716
      %v718 = vmul.f32 %v717, %v701
      %v719 = vsel %vm69, %v718, -inf
      %720 = vmax.xlane.f32.xlu0 %v719
      %v721 = vpop.xlane.xlu0 %720
      %v722 = vrot.slane %v721, 4
      %v723 = vmax.f32 %v721, %v722
      %v724 = vrot.slane %v723, 2
      %v725 = vmax.f32 %v723, %v724
      %v726 = vrot.slane %v725, 1
      %v727 = vmax.f32 %v725, %v726
      %s728 = vtos %v727
      %v729 = vstv %s728
      %vm730 = vcmp.eq.f32.partialorder %v718, %v729
      %v731 = vsel %vm730, %v41, 128.0
      %v732 = vsel %vm69, %v731, inf
      %733 = vmin.xlane.f32.xlu0 %v732
      %v734 = vpop.xlane.xlu0 %733
      %v735 = vrot.slane %v734, 4
      %v736 = vmin.f32 %v734, %v735
      %v737 = vrot.slane %v736, 2
      %v738 = vmin.f32 %v736, %v737
      %v739 = vrot.slane %v738, 1
      %v740 = vmin.f32 %v738, %v739
      %s741 = vtos %v740
      %v742 = vstv %s741
      %vm743 = vcmp.eq.f32.partialorder %v41, %v742
      %vm744 = vcmp.gt.f32.partialorder %v729, 0.0
      %v745 = vsel %vm744, 1, 0
      %vm746 = vcmp.eq.s32.totalorder %v745, 1
      %vm747 = vmand %vm743, %vm746
      %v748 = vsel %vm747, 1.0, 0.0
      %v749 = vsel %vm747, 0.0, %v718
      %v750 = vsel %vm69, %v749, -inf
      %751 = vmax.xlane.f32.xlu0 %v750
      %v752 = vpop.xlane.xlu0 %751
      %v753 = vrot.slane %v752, 4
      %v754 = vmax.f32 %v752, %v753
      %v755 = vrot.slane %v754, 2
      %v756 = vmax.f32 %v754, %v755
      %v757 = vrot.slane %v756, 1
      %v758 = vmax.f32 %v756, %v757
      %s759 = vtos %v758
      %v760 = vstv %s759
      %vm761 = vcmp.eq.f32.partialorder %v749, %v760
      %v762 = vsel %vm761, %v41, 128.0
      %v763 = vsel %vm69, %v762, inf
      %764 = vmin.xlane.f32.xlu0 %v763
      %v765 = vpop.xlane.xlu0 %764
      %v766 = vrot.slane %v765, 4
      %v767 = vmin.f32 %v765, %v766
      %v768 = vrot.slane %v767, 2
      %v769 = vmin.f32 %v767, %v768
      %v770 = vrot.slane %v769, 1
      %v771 = vmin.f32 %v769, %v770
      %s772 = vtos %v771
      %v773 = vstv %s772
      %vm774 = vcmp.eq.f32.partialorder %v41, %v773
      %vm775 = vcmp.gt.f32.partialorder %v760, 0.0
      %v776 = vsel %vm775, 1, 0
      %vm777 = vcmp.eq.s32.totalorder %v776, 1
      %vm778 = vmand %vm774, %vm777
      %v779 = vsel %vm778, 1.0, %v748
      %v780 = vsel %vm778, 0.0, %v749
      %v781 = vsel %vm69, %v780, -inf
      %782 = vmax.xlane.f32.xlu0 %v781
      %v783 = vpop.xlane.xlu0 %782
      %v784 = vrot.slane %v783, 4
      %v785 = vmax.f32 %v783, %v784
      %v786 = vrot.slane %v785, 2
      %v787 = vmax.f32 %v785, %v786
      %v788 = vrot.slane %v787, 1
      %v789 = vmax.f32 %v787, %v788
      %s790 = vtos %v789
      %v791 = vstv %s790
      %vm792 = vcmp.eq.f32.partialorder %v780, %v791
      %v793 = vsel %vm792, %v41, 128.0
      %v794 = vsel %vm69, %v793, inf
      %795 = vmin.xlane.f32.xlu0 %v794
      %v796 = vpop.xlane.xlu0 %795
      %v797 = vrot.slane %v796, 4
      %v798 = vmin.f32 %v796, %v797
      %v799 = vrot.slane %v798, 2
      %v800 = vmin.f32 %v798, %v799
      %v801 = vrot.slane %v800, 1
      %v802 = vmin.f32 %v800, %v801
      %s803 = vtos %v802
      %v804 = vstv %s803
      %vm805 = vcmp.eq.f32.partialorder %v41, %v804
      %vm806 = vcmp.gt.f32.partialorder %v791, 0.0
      %v807 = vsel %vm806, 1, 0
      %vm808 = vcmp.eq.s32.totalorder %v807, 1
      %vm809 = vmand %vm805, %vm808
      %v810 = vsel %vm809, 1.0, %v779
      %v811 = vsel %vm809, 0.0, %v780
      %v812 = vsel %vm69, %v811, -inf
      %813 = vmax.xlane.f32.xlu0 %v812
      %v814 = vpop.xlane.xlu0 %813
      %v815 = vrot.slane %v814, 4
      %v816 = vmax.f32 %v814, %v815
      %v817 = vrot.slane %v816, 2
      %v818 = vmax.f32 %v816, %v817
      %v819 = vrot.slane %v818, 1
      %v820 = vmax.f32 %v818, %v819
      %s821 = vtos %v820
      %v822 = vstv %s821
      %vm823 = vcmp.eq.f32.partialorder %v811, %v822
      %v824 = vsel %vm823, %v41, 128.0
      %v825 = vsel %vm69, %v824, inf
      %826 = vmin.xlane.f32.xlu0 %v825
      %v827 = vpop.xlane.xlu0 %826
      %v828 = vrot.slane %v827, 4
      %v829 = vmin.f32 %v827, %v828
      %v830 = vrot.slane %v829, 2
      %v831 = vmin.f32 %v829, %v830
      %v832 = vrot.slane %v831, 1
      %v833 = vmin.f32 %v831, %v832
      %s834 = vtos %v833
      %v835 = vstv %s834
      %vm836 = vcmp.eq.f32.partialorder %v41, %v835
      %vm837 = vcmp.gt.f32.partialorder %v822, 0.0
      %v838 = vsel %vm837, 1, 0
      %vm839 = vcmp.eq.s32.totalorder %v838, 1
      %vm840 = vmand %vm836, %vm839
      %v841 = vsel %vm840, 1.0, %v810
      %v842 = vsel %vm840, 0.0, %v811
      %v843 = vsel %vm69, %v842, -inf
      %844 = vmax.xlane.f32.xlu0 %v843
      %v845 = vpop.xlane.xlu0 %844
      %v846 = vrot.slane %v845, 4
      %v847 = vmax.f32 %v845, %v846
      %v848 = vrot.slane %v847, 2
      %v849 = vmax.f32 %v847, %v848
      %v850 = vrot.slane %v849, 1
      %v851 = vmax.f32 %v849, %v850
      %s852 = vtos %v851
      %v853 = vstv %s852
      %vm854 = vcmp.eq.f32.partialorder %v842, %v853
      %v855 = vsel %vm854, %v41, 128.0
      %v856 = vsel %vm69, %v855, inf
      %857 = vmin.xlane.f32.xlu0 %v856
      %v858 = vpop.xlane.xlu0 %857
      %v859 = vrot.slane %v858, 4
      %v860 = vmin.f32 %v858, %v859
      %v861 = vrot.slane %v860, 2
      %v862 = vmin.f32 %v860, %v861
      %v863 = vrot.slane %v862, 1
      %v864 = vmin.f32 %v862, %v863
      %s865 = vtos %v864
      %v866 = vstv %s865
      %vm867 = vcmp.eq.f32.partialorder %v41, %v866
      %vm868 = vcmp.gt.f32.partialorder %v853, 0.0
      %v869 = vsel %vm868, 1, 0
      %vm870 = vcmp.eq.s32.totalorder %v869, 1
      %vm871 = vmand %vm867, %vm870
      %v872 = vsel %vm871, 1.0, %v841
      %v873 = vsel %vm871, 0.0, %v842
      %v874 = vsel %vm69, %v873, -inf
      %875 = vmax.xlane.f32.xlu0 %v874
      %v876 = vpop.xlane.xlu0 %875
      %v877 = vrot.slane %v876, 4
      %v878 = vmax.f32 %v876, %v877
      %v879 = vrot.slane %v878, 2
      %v880 = vmax.f32 %v878, %v879
      %v881 = vrot.slane %v880, 1
      %v882 = vmax.f32 %v880, %v881
      %s883 = vtos %v882
      %v884 = vstv %s883
      %vm885 = vcmp.eq.f32.partialorder %v873, %v884
      %v886 = vsel %vm885, %v41, 128.0
      %v887 = vsel %vm69, %v886, inf
      %888 = vmin.xlane.f32.xlu0 %v887
      %v889 = vpop.xlane.xlu0 %888
      %v890 = vrot.slane %v889, 4
      %v891 = vmin.f32 %v889, %v890
      %v892 = vrot.slane %v891, 2
      %v893 = vmin.f32 %v891, %v892
      %v894 = vrot.slane %v893, 1
      %v895 = vmin.f32 %v893, %v894
      %s896 = vtos %v895
      %v897 = vstv %s896
      %vm898 = vcmp.eq.f32.partialorder %v41, %v897
      %vm899 = vcmp.gt.f32.partialorder %v884, 0.0
      %v900 = vsel %vm899, 1, 0
      %vm901 = vcmp.eq.s32.totalorder %v900, 1
      %vm902 = vmand %vm898, %vm901
      %v903 = vsel %vm902, 1.0, %v872
      %v904 = vsel %vm902, 0.0, %v873
      %v905 = vsel %vm69, %v904, -inf
      %906 = vmax.xlane.f32.xlu0 %v905
      %v907 = vpop.xlane.xlu0 %906
      %v908 = vrot.slane %v907, 4
      %v909 = vmax.f32 %v907, %v908
      %v910 = vrot.slane %v909, 2
      %v911 = vmax.f32 %v909, %v910
      %v912 = vrot.slane %v911, 1
      %v913 = vmax.f32 %v911, %v912
      %s914 = vtos %v913
      %v915 = vstv %s914
      %vm916 = vcmp.eq.f32.partialorder %v904, %v915
      %v917 = vsel %vm916, %v41, 128.0
      %v918 = vsel %vm69, %v917, inf
      %919 = vmin.xlane.f32.xlu0 %v918
      %v920 = vpop.xlane.xlu0 %919
      %v921 = vrot.slane %v920, 4
      %v922 = vmin.f32 %v920, %v921
      %v923 = vrot.slane %v922, 2
      %v924 = vmin.f32 %v922, %v923
      %v925 = vrot.slane %v924, 1
      %v926 = vmin.f32 %v924, %v925
      %s927 = vtos %v926
      %v928 = vstv %s927
      %vm929 = vcmp.eq.f32.partialorder %v41, %v928
      %vm930 = vcmp.gt.f32.partialorder %v915, 0.0
      %v931 = vsel %vm930, 1, 0
      %vm932 = vcmp.eq.s32.totalorder %v931, 1
      %vm933 = vmand %vm929, %vm932
      %v934 = vsel %vm933, 1.0, %v903
      %v935 = vsel %vm933, 0.0, %v904
      %v936 = vsel %vm69, %v935, -inf
      %937 = vmax.xlane.f32.xlu0 %v936
      %v938 = vpop.xlane.xlu0 %937
      %v939 = vrot.slane %v938, 4
      %v940 = vmax.f32 %v938, %v939
      %v941 = vrot.slane %v940, 2
      %v942 = vmax.f32 %v940, %v941
      %v943 = vrot.slane %v942, 1
      %v944 = vmax.f32 %v942, %v943
      %s945 = vtos %v944
      %v946 = vstv %s945
      %vm947 = vcmp.eq.f32.partialorder %v935, %v946
      %v948 = vsel %vm947, %v41, 128.0
      %v949 = vsel %vm69, %v948, inf
      %950 = vmin.xlane.f32.xlu0 %v949
      %v951 = vpop.xlane.xlu0 %950
      %v952 = vrot.slane %v951, 4
      %v953 = vmin.f32 %v951, %v952
      %v954 = vrot.slane %v953, 2
      %v955 = vmin.f32 %v953, %v954
      %v956 = vrot.slane %v955, 1
      %v957 = vmin.f32 %v955, %v956
      %s958 = vtos %v957
      %v959 = vstv %s958
      %vm960 = vcmp.eq.f32.partialorder %v41, %v959
      %vm961 = vcmp.gt.f32.partialorder %v946, 0.0
      %v962 = vsel %vm961, 1, 0
      %vm963 = vcmp.eq.s32.totalorder %v962, 1
      %vm964 = vmand %vm960, %vm963
      %v965 = vsel %vm964, 1.0, %v934
      %v966 = vmul.f32 %v717, %v965
      %v967 = vmul.f32 %v38, %v966
      %968 = vadd.xlane.f32.xlu0 %v967
      %v969 = vpop.xlane.xlu0 %968
      %v970 = vmul.f32 %v969, 1.5
      %v972 = vlaneseq
      %v973 = vshrl.u32 %v972, 7
      %v974 = vsub.s32 0, %v973
      %v975 = vrot.slane %v701, %v974
      %v977 = vsel %vm373, %v975, 0.0
      %v978 = vsel %vm372, %v965, %v977
      %v979 = vsel %vm371, %v717, %v978
      %980 = vst [vmem:[%s6] sm:$0xff] %v979
      %981 = vst [vmem:[%s7] sm:$0xff] %v970
      %982 = vst [vmem:[#allocation4] sm:$0xff] %v705
    $region25: #{_forward_step.1} parent=1 // pred_fallthru
      _
    // Predicated region
    $region26: #{_forward_step.1} parent=1 // pred_check
      _
    $region27: #{_forward_step.1} parent=1 // pred_check_branch
      %984 = sbr.rel (0) target = $region29
    $region28: #{_forward_step.1} parent=1 // pred_region
      _
    $region29: #{_forward_step.1} parent=1 // pred_fallthru
      _
    // Predicated region
    $region30: #{_forward_step.1} parent=1 // pred_check
      _
    $region31: #{_forward_step.1} parent=1 // pred_check_branch
      %986 = sbr.rel (0) target = $region33
    $region32: #{_forward_step.1} parent=1 // pred_region
      _
    $region33: #{_forward_step.1} parent=1 // pred_fallthru
      _
    // Predicated region
    $region34: #{_forward_step.1} parent=1 // pred_check
      _
    $region35: #{_forward_step.1} parent=1 // pred_check_branch
      %988 = sbr.rel (0) target = $region37
    $region36: #{_forward_step.1} parent=1 // pred_region
      %s990 = ssub.s32 128, 128
      %991 = vsyncadd [#allocation5], %s990
      %s993 = sshll.u32 [#allocation4], 4
      %s994 = int_to_ptr.vmem [resolvable:$true] %s993
      %996 = dma.vmem_to_hbm [thread:$0]  %s994, 128, %s8, [#allocation5]
    $region37: #{_forward_step.1} parent=1 // pred_fallthru
      _
    // Predicated region
    $region38: #{_forward_step.1} parent=1 // pred_check
      _
    $region39: #{_forward_step.1} parent=1 // pred_check_branch
      %998 = sbr.rel (0) target = $region41
    $region40: #{_forward_step.1} parent=1 // pred_region
      _
    $region41: #{_forward_step.1} parent=1 // pred_fallthru
      _
    // Predicated region
    $region42: #{_forward_step.1} parent=1 // pred_check
      _
    $region43: #{_forward_step.1} parent=1 // pred_check_branch
      %1000 = sbr.rel (0) target = $region45
    $region44: #{_forward_step.1} parent=1 // pred_region
      _
    $region45: #{_forward_step.1} parent=1 // pred_fallthru
      _
    // Predicated region
    $region46: #{_forward_step.1} parent=1 // pred_check
      _
    $region47: #{_forward_step.1} parent=1 // pred_check_branch
      %1002 = sbr.rel (0) target = $region49
    $region48: #{_forward_step.1} parent=1 // pred_region
      %1003 = dma.done [#allocation5], 128
    $region49: #{_forward_step.1} parent=1 // pred_fallthru
      _
    %1004 = vsyncpa [#allocation5], 1

</llo_original>
